<compile_context>
chip_gen: v6e
topology: v6e:2x2x1
jax: 0.10.0
libtpu: 0.0.40
codegen_flags: <defaults>
</compile_context>

<pallas_src>
import functools

import jax
import jax.numpy as jnp
from jax import lax
from jax.experimental import pallas as pl
from jax.experimental.pallas import tpu as pltpu


def _round_up(x, m):
    return (x + m - 1) // m * m


def _cnn_patch_kernel(TM, P, cdt,
                      x_ref, w1_ref, b1_ref, w2_ref, b2_ref, w3_ref, b3_ref,
                      wf_ref, bf_ref, out_ref, buf1, buf2, buf3):
    """One grid step = TM patches, each of length P with Cin input channels."""
    L1, L2, L3 = P, P // 2, P // 4
    R1, R2, R3 = TM * L1, TM * L2, TM * L3

    # Stage this step's TM patches into the padded conv1 input buffer
    # (data row i lives at buffer row i + 1; rows 0 / R+1 are junk but are
    # always masked out, so no zero-fill is ever needed).
    buf1[pl.ds(1, R1), :] = x_ref[...]

    def _local_pos_eq(n_rows, cols, period, value):
        # mask[r, :] = ((r mod period) == value)
        idx = lax.broadcasted_iota(jnp.int32, (n_rows, cols), 0)
        if (period & (period - 1)) == 0:
            local = idx & (period - 1)
        else:
            local = idx % period
        return local == value

    def conv_relu_pool(buf, L, w_ref, b_ref):
        # maxpool2(relu(conv1d_k3p1(input))) with the conv's even / odd output
        # rows computed as two fused im2col matmuls.
        R = TM * L
        Rh = R // 2
        Cin = w_ref.shape[0] // 3
        w = w_ref[...]                                   # (3*Cin, Cout) bf16
        b = b_ref[...]                                   # (1, Cout)    f32
        half = L // 2
        kill_first = _local_pos_eq(Rh, Cin, half, 0)         # patch pos == 0
        kill_last = _local_pos_eq(Rh, Cin, half, half - 1)   # patch pos == L-1

        def half_rows(s0, s1, s2, kl, kr):
            tl = buf[pl.ds(s0, Rh, 2), :]
            tc = buf[pl.ds(s1, Rh, 2), :]
            tr = buf[pl.ds(s2, Rh, 2), :]
            if kl is not None:
                tl = jnp.where(kl, 0.0, tl)
            if kr is not None:
                tr = jnp.where(kr, 0.0, tr)
            col = jnp.concatenate([tl, tc, tr], axis=1).astype(cdt)
            acc = jnp.dot(col, w, preferred_element_type=jnp.float32) + b
            return jnp.maximum(acc, 0.0)

        h_even = half_rows(0, 1, 2, kill_first, None)    # conv rows 2j
        h_odd = half_rows(1, 2, 3, None, kill_last)      # conv rows 2j+1
        return jnp.maximum(h_even, h_odd)                # (R//2, Cout)

    p1 = conv_relu_pool(buf1, L1, w1_ref, b1_ref)        # (R2, 64)
    buf2[pl.ds(1, R2), :] = p1
    p2 = conv_relu_pool(buf2, L2, w2_ref, b2_ref)        # (R3, 128)
    buf3[pl.ds(1, R3), :] = p2

    # conv3 + ReLU + adaptive_avg_pool1d(., 1): L3 grouped (stride-L3) im2col
    # matmuls, accumulated into the per-patch mean.
    w3 = w3_ref[...]
    b3 = b3_ref[...]
    Cin3 = w3_ref.shape[0] // 3
    Cout3 = w3_ref.shape[1]
    g = jnp.zeros((TM, Cout3), jnp.float32)
    for p in range(L3):                                  # L3 == P//4, static unroll
        tl = (jnp.zeros((TM, Cin3), jnp.float32) if p == 0
              else buf3[pl.ds(p, TM, L3), :])
        tc = buf3[pl.ds(p + 1, TM, L3), :]
        tr = (jnp.zeros((TM, Cin3), jnp.float32) if p == L3 - 1
              else buf3[pl.ds(p + 2, TM, L3), :])
        col = jnp.concatenate([tl, tc, tr], axis=1).astype(cdt)
        h = jnp.maximum(
            jnp.dot(col, w3, preferred_element_type=jnp.float32) + b3, 0.0)
        g = g + h
    g = g * (1.0 / L3)                                   # (TM, 256)

    # fc: Linear(256 -> embed_dim), written as a lane-amortized (TM, E) slab.
    y = jnp.dot(g.astype(cdt), wf_ref[...],
                preferred_element_type=jnp.float32) + bf_ref[...]
    out_ref[...] = y.astype(out_ref.dtype)


def cnn_patch_embedding(x, params, patch_size, embed_dim, *,
                        block_patches=128, compute_dtype=jnp.bfloat16):
    """x: (B, C, L) float32  ->  (B, num_patches, embed_dim) float32."""
    w1, b1, w2, b2, w3, b3, wf, bf = params
    B, C, L = x.shape
    P = patch_size
    assert P % 4 == 0, "patch_size must be divisible by 4 (two maxpool(2))"
    N = L // P
    M = B * N
    E = embed_dim

    x = x[:, :, :N * P].astype(jnp.float32)
    # torch .view semantics: raw row-major reinterpretation (no permute).
    xm = x.reshape(B, C, N, P).reshape(M, C, P)
    # Channel-last flat rows: row m*P + p holds the channels of patch m, pos p.
    # TODO(synk): this small transpose could also be folded into the kernel
    # (in-VMEM einshape on the (TM, C, P) tile) to save one HBM pass of x.
    xflat = jnp.transpose(xm, (0, 2, 1)).reshape(M * P, C)

    # Patches per grid step (multiple of 8 for sublane-aligned blocks); pad M.
    TM = _round_up(min(block_patches, _round_up(M, 8)), 8)
    Mp = _round_up(M, TM)
    if Mp != M:
        xflat = jnp.concatenate(
            [xflat, jnp.zeros(((Mp - M) * P, C), jnp.float32)], axis=0)

    cdt = compute_dtype
    # im2col-folded conv weights: (3, Cin, Cout) -> (3*Cin, Cout), pre-cast.
    w1c = w1.reshape(3 * C, 64).astype(cdt)
    w2c = w2.reshape(3 * 64, 128).astype(cdt)
    w3c = w3.reshape(3 * 128, 256).astype(cdt)
    wfc = wf.astype(cdt)
    b1f = b1.astype(jnp.float32)
    b2f = b2.astype(jnp.float32)
    b3f = b3.astype(jnp.float32)
    bff = bf.astype(jnp.float32)

    kernel = functools.partial(_cnn_patch_kernel, TM, P, cdt)
    out = pl.pallas_call(
        kernel,
        out_shape=jax.ShapeDtypeStruct((Mp, E), jnp.float32),
        grid_spec=pltpu.PrefetchScalarGridSpec(
            num_scalar_prefetch=0,
            grid=(Mp // TM,),
            in_specs=[
                pl.BlockSpec((TM * P, C), lambda i: (i, 0)),      # x (flat rows)
                pl.BlockSpec((3 * C, 64), lambda i: (0, 0)),      # conv1 w (im2col)
                pl.BlockSpec((1, 64), lambda i: (0, 0)),          # conv1 b
                pl.BlockSpec((3 * 64, 128), lambda i: (0, 0)),    # conv2 w
                pl.BlockSpec((1, 128), lambda i: (0, 0)),         # conv2 b
                pl.BlockSpec((3 * 128, 256), lambda i: (0, 0)),   # conv3 w
                pl.BlockSpec((1, 256), lambda i: (0, 0)),         # conv3 b
                pl.BlockSpec((256, E), lambda i: (0, 0)),         # fc w
                pl.BlockSpec((1, E), lambda i: (0, 0)),           # fc b
            ],
            out_specs=pl.BlockSpec((TM, E), lambda i: (i, 0)),
            scratch_shapes=[
                pltpu.VMEM((TM * P + 8, C), jnp.float32),         # conv1 in (padded)
                pltpu.VMEM((TM * P // 2 + 8, 64), jnp.float32),   # conv2 in (padded)
                pltpu.VMEM((TM * P // 4 + 8, 128), jnp.float32),  # conv3 in (padded)
            ],
        ),
        compiler_params=pltpu.CompilerParams(
            dimension_semantics=("parallel",),        # independent patch blocks
            vmem_limit_bytes=32 * 1024 * 1024,        # safe on v5e/v6e/v7x
        ),
    )(xflat, w1c, b1f, w2c, b2f, w3c, b3f, wfc, bff)

    return out[:M].reshape(B, N, E)


def _reference(xk, params):
    """Plain-JAX f32 reference of the same math (channel-last), for validation."""
    w1, b1, w2, b2, w3, b3, wf, bf = params

    def conv_relu(h, w, b):
        Lh = h.shape[1]
        hp = jnp.pad(h, ((0, 0), (1, 1), (0, 0)))
        acc = jnp.zeros((h.shape[0], Lh, w.shape[2]), jnp.float32)
        for k in range(3):
            acc = acc + jnp.einsum('mlc,cd->mld', hp[:, k:k + Lh, :], w[k])
        return jax.nn.relu(acc + b[None, :, :])

    def pool(h):
        Mm, Lh, Cc = h.shape
        return jnp.max(h.reshape(Mm, Lh // 2, 2, Cc), axis=2)

    h = pool(conv_relu(xk, w1, b1))
    h = pool(conv_relu(h, w2, b2))
    h = conv_relu(h, w3, b3)
    g = jnp.mean(h, axis=1)
    return g @ wf + bf


if __name__ == "__main__":
    B, C, SEQ = 2, 4, 64          # batch, num_channels, seq_length
    PATCH = 16                    # patch_size
    EMBED = 32                    # embed_dim

    key = jax.random.PRNGKey(0)
    ks = jax.random.split(key, 9)
    init = lambda k, shape: jax.random.normal(k, shape, jnp.float32) * 0.1
    # Synthetic parameters (conv weights as (k, Cin, Cout), fc weight (in, out)).
    params = (
        init(ks[0], (3, C, 64)),    init(ks[1], (1, 64)),      # conv1
        init(ks[2], (3, 64, 128)),  init(ks[3], (1, 128)),     # conv2
        init(ks[4], (3, 128, 256)), init(ks[5], (1, 256)),     # conv3
        init(ks[6], (256, EMBED)),  init(ks[7], (1, EMBED)),   # fc
    )
    x = jax.random.normal(ks[8], (B, C, SEQ), jnp.float32)

    out = cnn_patch_embedding(x, params, PATCH, EMBED)
    out = jax.block_until_ready(out)
    assert out.shape == (B, SEQ // PATCH, EMBED)

    # Cross-check against the plain-JAX f32 reference (kernel uses bf16 MXU
    # operands with f32 accumulation, so tolerance is loosened accordingly).
    N = SEQ // PATCH
    xm = x[:, :, :N * PATCH].reshape(B, C, N, PATCH).reshape(B * N, C, PATCH)
    xk = jnp.transpose(xm, (0, 2, 1))
    ref = _reference(xk, params).reshape(B, N, EMBED)
    max_err = float(jnp.max(jnp.abs(out - ref)))
    assert jnp.allclose(out, ref, atol=5e-2, rtol=5e-2), max_err

    print("KERNEL_OK")
</pallas_src>

<mosaic_0001>
module attributes {stable_mosaic.version = 11 : i64} {
  func.func @_cnn_patch_kernel(%arg0: i32, %arg1: memref<128x4xf32, #tpu.memory_space<vmem>>, %arg2: memref<12x64xbf16, #tpu.memory_space<vmem>>, %arg3: memref<1x64xf32, #tpu.memory_space<vmem>>, %arg4: memref<192x128xbf16, #tpu.memory_space<vmem>>, %arg5: memref<1x128xf32, #tpu.memory_space<vmem>>, %arg6: memref<384x256xbf16, #tpu.memory_space<vmem>>, %arg7: memref<1x256xf32, #tpu.memory_space<vmem>>, %arg8: memref<256x32xbf16, #tpu.memory_space<vmem>>, %arg9: memref<1x32xf32, #tpu.memory_space<vmem>>, %arg10: memref<8x32xf32, #tpu.memory_space<vmem>>, %arg11: memref<136x4xf32, #tpu.memory_space<vmem>>, %arg12: memref<72x64xf32, #tpu.memory_space<vmem>>, %arg13: memref<40x128xf32, #tpu.memory_space<vmem>>) attributes {dimension_semantics = [#tpu.dimension_semantics<parallel>], iteration_bounds = array<i64: 1>, scalar_prefetch = 0 : i64, scratch_operands = 3 : i64, tpu.core_type = #tpu.core_type<tc>, window_params = [{transform_indices = @transform_0, window_bounds = array<i64: 128, 4>}, {pipeline_mode = #tpu.pipeline_mode<synchronous>, transform_indices = @transform_1, window_bounds = array<i64: 12, 64>}, {pipeline_mode = #tpu.pipeline_mode<synchronous>, transform_indices = @transform_2, window_bounds = array<i64: 1, 64>}, {pipeline_mode = #tpu.pipeline_mode<synchronous>, transform_indices = @transform_3, window_bounds = array<i64: 192, 128>}, {pipeline_mode = #tpu.pipeline_mode<synchronous>, transform_indices = @transform_4, window_bounds = array<i64: 1, 128>}, {pipeline_mode = #tpu.pipeline_mode<synchronous>, transform_indices = @transform_5, window_bounds = array<i64: 384, 256>}, {pipeline_mode = #tpu.pipeline_mode<synchronous>, transform_indices = @transform_6, window_bounds = array<i64: 1, 256>}, {pipeline_mode = #tpu.pipeline_mode<synchronous>, transform_indices = @transform_7, window_bounds = array<i64: 256, 32>}, {pipeline_mode = #tpu.pipeline_mode<synchronous>, transform_indices = @transform_8, window_bounds = array<i64: 1, 32>}, {transform_indices = @transform_9, window_bounds = array<i64: 8, 32>}]} {
    %c0 = arith.constant 0 : index
    %c0_0 = arith.constant 0 : index
    %0 = vector.load %arg1[%c0, %c0_0] : memref<128x4xf32, #tpu.memory_space<vmem>>, vector<128x4xf32>
    %c1 = arith.constant 1 : index
    %c0_1 = arith.constant 0 : index
    %1 = vector.load %arg11[%c1, %c0_1] : memref<136x4xf32, #tpu.memory_space<vmem>>, vector<128x4xf32>
    tpu.vector_store %arg11[%c1, %c0_1], %0 {strides = array<i32>} : memref<136x4xf32, #tpu.memory_space<vmem>>, vector<128x4xf32>,
    %c0_2 = arith.constant 0 : index
    %c0_3 = arith.constant 0 : index
    %2 = vector.load %arg2[%c0_2, %c0_3] : memref<12x64xbf16, #tpu.memory_space<vmem>>, vector<12x64xbf16>
    %c0_4 = arith.constant 0 : index
    %c0_5 = arith.constant 0 : index
    %3 = vector.load %arg3[%c0_4, %c0_5] : memref<1x64xf32, #tpu.memory_space<vmem>>, vector<1x64xf32>
    %4 = tpu.iota {dimensions = array<i32: 0>} : vector<64x4xi32>
    %c7_i32 = arith.constant 7 : i32
    %5 = vector.broadcast %c7_i32 : i32 to vector<64x4xi32>
    %6 = arith.andi %4, %5 : vector<64x4xi32>
    %c0_i32 = arith.constant 0 : i32
    %7 = vector.broadcast %c0_i32 : i32 to vector<64x4xi32>
    %8 = arith.cmpi eq, %6, %7 : vector<64x4xi32>
    %9 = tpu.iota {dimensions = array<i32: 0>} : vector<64x4xi32>
    %c7_i32_6 = arith.constant 7 : i32
    %10 = vector.broadcast %c7_i32_6 : i32 to vector<64x4xi32>
    %11 = arith.andi %9, %10 : vector<64x4xi32>
    %c7_i32_7 = arith.constant 7 : i32
    %12 = vector.broadcast %c7_i32_7 : i32 to vector<64x4xi32>
    %13 = arith.cmpi eq, %11, %12 : vector<64x4xi32>
    %c0_8 = arith.constant 0 : index
    %c0_9 = arith.constant 0 : index
    %14 = tpu.strided_load %arg11[%c0_8, %c0_9] {strides = array<i32: 2, 1>} : memref<136x4xf32, #tpu.memory_space<vmem>>, vector<64x4xf32>
    %c1_10 = arith.constant 1 : index
    %c0_11 = arith.constant 0 : index
    %15 = tpu.strided_load %arg11[%c1_10, %c0_11] {strides = array<i32: 2, 1>} : memref<136x4xf32, #tpu.memory_space<vmem>>, vector<64x4xf32>
    %c2 = arith.constant 2 : index
    %c0_12 = arith.constant 0 : index
    %16 = tpu.strided_load %arg11[%c2, %c0_12] {strides = array<i32: 2, 1>} : memref<136x4xf32, #tpu.memory_space<vmem>>, vector<64x4xf32>
    %cst = arith.constant 0.000000e+00 : f32
    %17 = vector.broadcast %cst : f32 to vector<64x4xf32>
    %18 = arith.select %8, %17, %14 : vector<64x4xi1>, vector<64x4xf32>
    %19 = tpu.concatenate %18, %15, %16 in 1 : vector<64x4xf32>, vector<64x4xf32>, vector<64x4xf32> -> vector<64x12xf32>
    %20 = arith.truncf %19 : vector<64x12xf32> to vector<64x12xbf16>
    %cst_13 = arith.constant dense<0.000000e+00> : vector<64x64xf32>
    %21 = tpu.matmul %20, %2, %cst_13 {dimension_numbers = #tpu.dot_dimension_numbers<[1], [0], [0], [1], [0, 0, 1, 1], [], []>} : vector<64x12xbf16>, vector<12x64xbf16>, vector<64x64xf32> -> vector<64x64xf32>
    %22 = vector.broadcast %3 : vector<1x64xf32> to vector<64x64xf32>
    %23 = arith.addf %21, %22 : vector<64x64xf32>
    %cst_14 = arith.constant 0.000000e+00 : f32
    %24 = vector.broadcast %cst_14 : f32 to vector<64x64xf32>
    %25 = arith.maximumf %23, %24 : vector<64x64xf32>
    %c1_15 = arith.constant 1 : index
    %c0_16 = arith.constant 0 : index
    %26 = tpu.strided_load %arg11[%c1_15, %c0_16] {strides = array<i32: 2, 1>} : memref<136x4xf32, #tpu.memory_space<vmem>>, vector<64x4xf32>
    %c2_17 = arith.constant 2 : index
    %c0_18 = arith.constant 0 : index
    %27 = tpu.strided_load %arg11[%c2_17, %c0_18] {strides = array<i32: 2, 1>} : memref<136x4xf32, #tpu.memory_space<vmem>>, vector<64x4xf32>
    %c3 = arith.constant 3 : index
    %c0_19 = arith.constant 0 : index
    %28 = tpu.strided_load %arg11[%c3, %c0_19] {strides = array<i32: 2, 1>} : memref<136x4xf32, #tpu.memory_space<vmem>>, vector<64x4xf32>
    %cst_20 = arith.constant 0.000000e+00 : f32
    %29 = vector.broadcast %cst_20 : f32 to vector<64x4xf32>
    %30 = arith.select %13, %29, %28 : vector<64x4xi1>, vector<64x4xf32>
    %31 = tpu.concatenate %26, %27, %30 in 1 : vector<64x4xf32>, vector<64x4xf32>, vector<64x4xf32> -> vector<64x12xf32>
    %32 = arith.truncf %31 : vector<64x12xf32> to vector<64x12xbf16>
    %cst_21 = arith.constant dense<0.000000e+00> : vector<64x64xf32>
    %33 = tpu.matmul %32, %2, %cst_21 {dimension_numbers = #tpu.dot_dimension_numbers<[1], [0], [0], [1], [0, 0, 1, 1], [], []>} : vector<64x12xbf16>, vector<12x64xbf16>, vector<64x64xf32> -> vector<64x64xf32>
    %34 = vector.broadcast %3 : vector<1x64xf32> to vector<64x64xf32>
    %35 = arith.addf %33, %34 : vector<64x64xf32>
    %cst_22 = arith.constant 0.000000e+00 : f32
    %36 = vector.broadcast %cst_22 : f32 to vector<64x64xf32>
    %37 = arith.maximumf %35, %36 : vector<64x64xf32>
    %38 = arith.maximumf %25, %37 : vector<64x64xf32>
    %c1_23 = arith.constant 1 : index
    %c0_24 = arith.constant 0 : index
    %39 = vector.load %arg12[%c1_23, %c0_24] : memref<72x64xf32, #tpu.memory_space<vmem>>, vector<64x64xf32>
    tpu.vector_store %arg12[%c1_23, %c0_24], %38 {strides = array<i32>} : memref<72x64xf32, #tpu.memory_space<vmem>>, vector<64x64xf32>,
    %c0_25 = arith.constant 0 : index
    %c0_26 = arith.constant 0 : index
    %40 = vector.load %arg4[%c0_25, %c0_26] : memref<192x128xbf16, #tpu.memory_space<vmem>>, vector<192x128xbf16>
    %c0_27 = arith.constant 0 : index
    %c0_28 = arith.constant 0 : index
    %41 = vector.load %arg5[%c0_27, %c0_28] : memref<1x128xf32, #tpu.memory_space<vmem>>, vector<1x128xf32>
    %42 = tpu.iota {dimensions = array<i32: 0>} : vector<32x64xi32>
    %c3_i32 = arith.constant 3 : i32
    %43 = vector.broadcast %c3_i32 : i32 to vector<32x64xi32>
    %44 = arith.andi %42, %43 : vector<32x64xi32>
    %c0_i32_29 = arith.constant 0 : i32
    %45 = vector.broadcast %c0_i32_29 : i32 to vector<32x64xi32>
    %46 = arith.cmpi eq, %44, %45 : vector<32x64xi32>
    %47 = tpu.iota {dimensions = array<i32: 0>} : vector<32x64xi32>
    %c3_i32_30 = arith.constant 3 : i32
    %48 = vector.broadcast %c3_i32_30 : i32 to vector<32x64xi32>
    %49 = arith.andi %47, %48 : vector<32x64xi32>
    %c3_i32_31 = arith.constant 3 : i32
    %50 = vector.broadcast %c3_i32_31 : i32 to vector<32x64xi32>
    %51 = arith.cmpi eq, %49, %50 : vector<32x64xi32>
    %c0_32 = arith.constant 0 : index
    %c0_33 = arith.constant 0 : index
    %52 = tpu.strided_load %arg12[%c0_32, %c0_33] {strides = array<i32: 2, 1>} : memref<72x64xf32, #tpu.memory_space<vmem>>, vector<32x64xf32>
    %c1_34 = arith.constant 1 : index
    %c0_35 = arith.constant 0 : index
    %53 = tpu.strided_load %arg12[%c1_34, %c0_35] {strides = array<i32: 2, 1>} : memref<72x64xf32, #tpu.memory_space<vmem>>, vector<32x64xf32>
    %c2_36 = arith.constant 2 : index
    %c0_37 = arith.constant 0 : index
    %54 = tpu.strided_load %arg12[%c2_36, %c0_37] {strides = array<i32: 2, 1>} : memref<72x64xf32, #tpu.memory_space<vmem>>, vector<32x64xf32>
    %cst_38 = arith.constant 0.000000e+00 : f32
    %55 = vector.broadcast %cst_38 : f32 to vector<32x64xf32>
    %56 = arith.select %46, %55, %52 : vector<32x64xi1>, vector<32x64xf32>
    %57 = tpu.concatenate %56, %53, %54 in 1 : vector<32x64xf32>, vector<32x64xf32>, vector<32x64xf32> -> vector<32x192xf32>
    %58 = arith.truncf %57 : vector<32x192xf32> to vector<32x192xbf16>
    %cst_39 = arith.constant dense<0.000000e+00> : vector<32x128xf32>
    %59 = tpu.matmul %58, %40, %cst_39 {dimension_numbers = #tpu.dot_dimension_numbers<[1], [0], [0], [1], [0, 0, 1, 1], [], []>} : vector<32x192xbf16>, vector<192x128xbf16>, vector<32x128xf32> -> vector<32x128xf32>
    %60 = vector.broadcast %41 : vector<1x128xf32> to vector<32x128xf32>
    %61 = arith.addf %59, %60 : vector<32x128xf32>
    %cst_40 = arith.constant 0.000000e+00 : f32
    %62 = vector.broadcast %cst_40 : f32 to vector<32x128xf32>
    %63 = arith.maximumf %61, %62 : vector<32x128xf32>
    %c1_41 = arith.constant 1 : index
    %c0_42 = arith.constant 0 : index
    %64 = tpu.strided_load %arg12[%c1_41, %c0_42] {strides = array<i32: 2, 1>} : memref<72x64xf32, #tpu.memory_space<vmem>>, vector<32x64xf32>
    %c2_43 = arith.constant 2 : index
    %c0_44 = arith.constant 0 : index
    %65 = tpu.strided_load %arg12[%c2_43, %c0_44] {strides = array<i32: 2, 1>} : memref<72x64xf32, #tpu.memory_space<vmem>>, vector<32x64xf32>
    %c3_45 = arith.constant 3 : index
    %c0_46 = arith.constant 0 : index
    %66 = tpu.strided_load %arg12[%c3_45, %c0_46] {strides = array<i32: 2, 1>} : memref<72x64xf32, #tpu.memory_space<vmem>>, vector<32x64xf32>
    %cst_47 = arith.constant 0.000000e+00 : f32
    %67 = vector.broadcast %cst_47 : f32 to vector<32x64xf32>
    %68 = arith.select %51, %67, %66 : vector<32x64xi1>, vector<32x64xf32>
    %69 = tpu.concatenate %64, %65, %68 in 1 : vector<32x64xf32>, vector<32x64xf32>, vector<32x64xf32> -> vector<32x192xf32>
    %70 = arith.truncf %69 : vector<32x192xf32> to vector<32x192xbf16>
    %cst_48 = arith.constant dense<0.000000e+00> : vector<32x128xf32>
    %71 = tpu.matmul %70, %40, %cst_48 {dimension_numbers = #tpu.dot_dimension_numbers<[1], [0], [0], [1], [0, 0, 1, 1], [], []>} : vector<32x192xbf16>, vector<192x128xbf16>, vector<32x128xf32> -> vector<32x128xf32>
    %72 = vector.broadcast %41 : vector<1x128xf32> to vector<32x128xf32>
    %73 = arith.addf %71, %72 : vector<32x128xf32>
    %cst_49 = arith.constant 0.000000e+00 : f32
    %74 = vector.broadcast %cst_49 : f32 to vector<32x128xf32>
    %75 = arith.maximumf %73, %74 : vector<32x128xf32>
    %76 = arith.maximumf %63, %75 : vector<32x128xf32>
    %c1_50 = arith.constant 1 : index
    %c0_51 = arith.constant 0 : index
    %77 = vector.load %arg13[%c1_50, %c0_51] : memref<40x128xf32, #tpu.memory_space<vmem>>, vector<32x128xf32>
    tpu.vector_store %arg13[%c1_50, %c0_51], %76 {strides = array<i32>} : memref<40x128xf32, #tpu.memory_space<vmem>>, vector<32x128xf32>,
    %c0_52 = arith.constant 0 : index
    %c0_53 = arith.constant 0 : index
    %78 = vector.load %arg6[%c0_52, %c0_53] : memref<384x256xbf16, #tpu.memory_space<vmem>>, vector<384x256xbf16>
    %c0_54 = arith.constant 0 : index
    %c0_55 = arith.constant 0 : index
    %79 = vector.load %arg7[%c0_54, %c0_55] : memref<1x256xf32, #tpu.memory_space<vmem>>, vector<1x256xf32>
    %cst_56 = arith.constant 0.000000e+00 : f32
    %80 = vector.broadcast %cst_56 : f32 to vector<8x256xf32>
    %cst_57 = arith.constant 0.000000e+00 : f32
    %81 = vector.broadcast %cst_57 : f32 to vector<8x128xf32>
    %c1_58 = arith.constant 1 : index
    %c0_59 = arith.constant 0 : index
    %82 = tpu.strided_load %arg13[%c1_58, %c0_59] {strides = array<i32: 4, 1>} : memref<40x128xf32, #tpu.memory_space<vmem>>, vector<8x128xf32>
    %c2_60 = arith.constant 2 : index
    %c0_61 = arith.constant 0 : index
    %83 = tpu.strided_load %arg13[%c2_60, %c0_61] {strides = array<i32: 4, 1>} : memref<40x128xf32, #tpu.memory_space<vmem>>, vector<8x128xf32>
    %84 = tpu.concatenate %81, %82, %83 in 1 : vector<8x128xf32>, vector<8x128xf32>, vector<8x128xf32> -> vector<8x384xf32>
    %85 = arith.truncf %84 : vector<8x384xf32> to vector<8x384xbf16>
    %cst_62 = arith.constant dense<0.000000e+00> : vector<8x256xf32>
    %86 = tpu.matmul %85, %78, %cst_62 {dimension_numbers = #tpu.dot_dimension_numbers<[1], [0], [0], [1], [0, 0, 1, 1], [], []>} : vector<8x384xbf16>, vector<384x256xbf16>, vector<8x256xf32> -> vector<8x256xf32>
    %87 = vector.broadcast %79 : vector<1x256xf32> to vector<8x256xf32>
    %88 = arith.addf %86, %87 : vector<8x256xf32>
    %cst_63 = arith.constant 0.000000e+00 : f32
    %89 = vector.broadcast %cst_63 : f32 to vector<8x256xf32>
    %90 = arith.maximumf %88, %89 : vector<8x256xf32>
    %91 = arith.addf %80, %90 : vector<8x256xf32>
    %c1_64 = arith.constant 1 : index
    %c0_65 = arith.constant 0 : index
    %92 = tpu.strided_load %arg13[%c1_64, %c0_65] {strides = array<i32: 4, 1>} : memref<40x128xf32, #tpu.memory_space<vmem>>, vector<8x128xf32>
    %c2_66 = arith.constant 2 : index
    %c0_67 = arith.constant 0 : index
    %93 = tpu.strided_load %arg13[%c2_66, %c0_67] {strides = array<i32: 4, 1>} : memref<40x128xf32, #tpu.memory_space<vmem>>, vector<8x128xf32>
    %c3_68 = arith.constant 3 : index
    %c0_69 = arith.constant 0 : index
    %94 = tpu.strided_load %arg13[%c3_68, %c0_69] {strides = array<i32: 4, 1>} : memref<40x128xf32, #tpu.memory_space<vmem>>, vector<8x128xf32>
    %95 = tpu.concatenate %92, %93, %94 in 1 : vector<8x128xf32>, vector<8x128xf32>, vector<8x128xf32> -> vector<8x384xf32>
    %96 = arith.truncf %95 : vector<8x384xf32> to vector<8x384xbf16>
    %cst_70 = arith.constant dense<0.000000e+00> : vector<8x256xf32>
    %97 = tpu.matmul %96, %78, %cst_70 {dimension_numbers = #tpu.dot_dimension_numbers<[1], [0], [0], [1], [0, 0, 1, 1], [], []>} : vector<8x384xbf16>, vector<384x256xbf16>, vector<8x256xf32> -> vector<8x256xf32>
    %98 = vector.broadcast %79 : vector<1x256xf32> to vector<8x256xf32>
    %99 = arith.addf %97, %98 : vector<8x256xf32>
    %cst_71 = arith.constant 0.000000e+00 : f32
    %100 = vector.broadcast %cst_71 : f32 to vector<8x256xf32>
    %101 = arith.maximumf %99, %100 : vector<8x256xf32>
    %102 = arith.addf %91, %101 : vector<8x256xf32>
    %c2_72 = arith.constant 2 : index
    %c0_73 = arith.constant 0 : index
    %103 = tpu.strided_load %arg13[%c2_72, %c0_73] {strides = array<i32: 4, 1>} : memref<40x128xf32, #tpu.memory_space<vmem>>, vector<8x128xf32>
    %c3_74 = arith.constant 3 : index
    %c0_75 = arith.constant 0 : index
    %104 = tpu.strided_load %arg13[%c3_74, %c0_75] {strides = array<i32: 4, 1>} : memref<40x128xf32, #tpu.memory_space<vmem>>, vector<8x128xf32>
    %c4 = arith.constant 4 : index
    %c0_76 = arith.constant 0 : index
    %105 = tpu.strided_load %arg13[%c4, %c0_76] {strides = array<i32: 4, 1>} : memref<40x128xf32, #tpu.memory_space<vmem>>, vector<8x128xf32>
    %106 = tpu.concatenate %103, %104, %105 in 1 : vector<8x128xf32>, vector<8x128xf32>, vector<8x128xf32> -> vector<8x384xf32>
    %107 = arith.truncf %106 : vector<8x384xf32> to vector<8x384xbf16>
    %cst_77 = arith.constant dense<0.000000e+00> : vector<8x256xf32>
    %108 = tpu.matmul %107, %78, %cst_77 {dimension_numbers = #tpu.dot_dimension_numbers<[1], [0], [0], [1], [0, 0, 1, 1], [], []>} : vector<8x384xbf16>, vector<384x256xbf16>, vector<8x256xf32> -> vector<8x256xf32>
    %109 = vector.broadcast %79 : vector<1x256xf32> to vector<8x256xf32>
    %110 = arith.addf %108, %109 : vector<8x256xf32>
    %cst_78 = arith.constant 0.000000e+00 : f32
    %111 = vector.broadcast %cst_78 : f32 to vector<8x256xf32>
    %112 = arith.maximumf %110, %111 : vector<8x256xf32>
    %113 = arith.addf %102, %112 : vector<8x256xf32>
    %c3_79 = arith.constant 3 : index
    %c0_80 = arith.constant 0 : index
    %114 = tpu.strided_load %arg13[%c3_79, %c0_80] {strides = array<i32: 4, 1>} : memref<40x128xf32, #tpu.memory_space<vmem>>, vector<8x128xf32>
    %c4_81 = arith.constant 4 : index
    %c0_82 = arith.constant 0 : index
    %115 = tpu.strided_load %arg13[%c4_81, %c0_82] {strides = array<i32: 4, 1>} : memref<40x128xf32, #tpu.memory_space<vmem>>, vector<8x128xf32>
    %cst_83 = arith.constant 0.000000e+00 : f32
    %116 = vector.broadcast %cst_83 : f32 to vector<8x128xf32>
    %117 = tpu.concatenate %114, %115, %116 in 1 : vector<8x128xf32>, vector<8x128xf32>, vector<8x128xf32> -> vector<8x384xf32>
    %118 = arith.truncf %117 : vector<8x384xf32> to vector<8x384xbf16>
    %cst_84 = arith.constant dense<0.000000e+00> : vector<8x256xf32>
    %119 = tpu.matmul %118, %78, %cst_84 {dimension_numbers = #tpu.dot_dimension_numbers<[1], [0], [0], [1], [0, 0, 1, 1], [], []>} : vector<8x384xbf16>, vector<384x256xbf16>, vector<8x256xf32> -> vector<8x256xf32>
    %120 = vector.broadcast %79 : vector<1x256xf32> to vector<8x256xf32>
    %121 = arith.addf %119, %120 : vector<8x256xf32>
    %cst_85 = arith.constant 0.000000e+00 : f32
    %122 = vector.broadcast %cst_85 : f32 to vector<8x256xf32>
    %123 = arith.maximumf %121, %122 : vector<8x256xf32>
    %124 = arith.addf %113, %123 : vector<8x256xf32>
    %cst_86 = arith.constant 2.500000e-01 : f32
    %125 = vector.broadcast %cst_86 : f32 to vector<8x256xf32>
    %126 = arith.mulf %124, %125 : vector<8x256xf32>
    %127 = arith.truncf %126 : vector<8x256xf32> to vector<8x256xbf16>
    %c0_87 = arith.constant 0 : index
    %c0_88 = arith.constant 0 : index
    %128 = vector.load %arg8[%c0_87, %c0_88] : memref<256x32xbf16, #tpu.memory_space<vmem>>, vector<256x32xbf16>
    %cst_89 = arith.constant dense<0.000000e+00> : vector<8x32xf32>
    %129 = tpu.matmul %127, %128, %cst_89 {dimension_numbers = #tpu.dot_dimension_numbers<[1], [0], [0], [1], [0, 0, 1, 1], [], []>} : vector<8x256xbf16>, vector<256x32xbf16>, vector<8x32xf32> -> vector<8x32xf32>
    %c0_90 = arith.constant 0 : index
    %c0_91 = arith.constant 0 : index
    %130 = vector.load %arg9[%c0_90, %c0_91] : memref<1x32xf32, #tpu.memory_space<vmem>>, vector<1x32xf32>
    %131 = vector.broadcast %130 : vector<1x32xf32> to vector<8x32xf32>
    %132 = arith.addf %129, %131 : vector<8x32xf32>
    %c0_92 = arith.constant 0 : index
    %c0_93 = arith.constant 0 : index
    %133 = vector.load %arg10[%c0_92, %c0_93] : memref<8x32xf32, #tpu.memory_space<vmem>>, vector<8x32xf32>
    tpu.vector_store %arg10[%c0_92, %c0_93], %132 {strides = array<i32>} : memref<8x32xf32, #tpu.memory_space<vmem>>, vector<8x32xf32>,
    return
  }
  func.func @transform_0(%arg0: i32) -> (i32, i32) {
    %c0_i32 = arith.constant 0 : i32
    %c0_i32_0 = arith.constant 0 : i32
    return %arg0, %c0_i32 : i32, i32
  }
  func.func @transform_1(%arg0: i32) -> (i32, i32) {
    %c0_i32 = arith.constant 0 : i32
    %c0_i32_0 = arith.constant 0 : i32
    %c0_i32_1 = arith.constant 0 : i32
    return %c0_i32, %c0_i32_0 : i32, i32
  }
  func.func @transform_2(%arg0: i32) -> (i32, i32) {
    %c0_i32 = arith.constant 0 : i32
    %c0_i32_0 = arith.constant 0 : i32
    %c0_i32_1 = arith.constant 0 : i32
    return %c0_i32, %c0_i32_0 : i32, i32
  }
  func.func @transform_3(%arg0: i32) -> (i32, i32) {
    %c0_i32 = arith.constant 0 : i32
    %c0_i32_0 = arith.constant 0 : i32
    %c0_i32_1 = arith.constant 0 : i32
    return %c0_i32, %c0_i32_0 : i32, i32
  }
  func.func @transform_4(%arg0: i32) -> (i32, i32) {
    %c0_i32 = arith.constant 0 : i32
    %c0_i32_0 = arith.constant 0 : i32
    %c0_i32_1 = arith.constant 0 : i32
    return %c0_i32, %c0_i32_0 : i32, i32
  }
  func.func @transform_5(%arg0: i32) -> (i32, i32) {
    %c0_i32 = arith.constant 0 : i32
    %c0_i32_0 = arith.constant 0 : i32
    %c0_i32_1 = arith.constant 0 : i32
    return %c0_i32, %c0_i32_0 : i32, i32
  }
  func.func @transform_6(%arg0: i32) -> (i32, i32) {
    %c0_i32 = arith.constant 0 : i32
    %c0_i32_0 = arith.constant 0 : i32
    %c0_i32_1 = arith.constant 0 : i32
    return %c0_i32, %c0_i32_0 : i32, i32
  }
  func.func @transform_7(%arg0: i32) -> (i32, i32) {
    %c0_i32 = arith.constant 0 : i32
    %c0_i32_0 = arith.constant 0 : i32
    %c0_i32_1 = arith.constant 0 : i32
    return %c0_i32, %c0_i32_0 : i32, i32
  }
  func.func @transform_8(%arg0: i32) -> (i32, i32) {
    %c0_i32 = arith.constant 0 : i32
    %c0_i32_0 = arith.constant 0 : i32
    %c0_i32_1 = arith.constant 0 : i32
    return %c0_i32, %c0_i32_0 : i32, i32
  }
  func.func @transform_9(%arg0: i32) -> (i32, i32) {
    %c0_i32 = arith.constant 0 : i32
    %c0_i32_0 = arith.constant 0 : i32
    return %arg0, %c0_i32 : i32, i32
  }
}

</mosaic_0001>

<llo_original>
// kernel: tpu_custom_call.1
$region0: #{tpu_custom_call.1}
  #allocation0 [shape = 'u32[]', space=smem, size = 0x4, offset = 0x4, fixed_abs, tag = 'smem constant byte address 0x4 - core index']
  #allocation1 [shape = 'u32[144,128]{1,0:T(1,128)}', space=vmem, size = 0x12000, scoped, tag = 'internal scratch']
  #allocation2 [shape = 'f32[136,4]{1,0:T(8,128)}', space=vmem, size = 0x11000, scoped, tag = 'scratch operand']
  #allocation3 [shape = 'f32[72,64]{1,0:T(8,128)}', space=vmem, size = 0x9000, scoped, tag = 'scratch operand']
  #allocation4 [shape = 'f32[40,128]{1,0:T(8,128)}', space=vmem, size = 0x5000, scoped, tag = 'scratch operand']
  %s0 = inlined_call_operand.vmem [shape: f32[128,4], index: 0, kind: input, shape index: {}]
  %s1 = inlined_call_operand.vmem [shape: bf16[12,64], index: 1, kind: input, shape index: {}]
  %s2 = inlined_call_operand.vmem [shape: f32[1,64], index: 2, kind: input, shape index: {}]
  %s3 = inlined_call_operand.vmem [shape: bf16[192,128], index: 3, kind: input, shape index: {}]
  %s4 = inlined_call_operand.vmem [shape: f32[1,128], index: 4, kind: input, shape index: {}]
  %s5 = inlined_call_operand.hbm [shape: bf16[384,256], index: 5, kind: input, shape index: {}]
  %s6 = inlined_call_operand.vmem [shape: f32[1,256], index: 6, kind: input, shape index: {}]
  %s7 = inlined_call_operand.vmem [shape: bf16[256,32], index: 7, kind: input, shape index: {}]
  %s8 = inlined_call_operand.vmem [shape: f32[1,32], index: 8, kind: input, shape index: {}]
  %s9 = inlined_call_operand.hbm [shape: f32[8,32], index: 9, kind: output, shape index: {}]
  %s10 = sld [smem:[#allocation0]]
  $region50: #{tpu_custom_call.1} parent=0
    _
  %s12 = ssub.s32 1, %s10
  %s13 = scalar_select 0, %s12, %s10
  $region1: #{tpu_custom_call.1} parent=0
    #allocation5 [shape = 'u8[196608]{0}', space=vmem, size = 0x30000, scoped, tag = 'input window, operand 5, single buffered']
    #allocation6 [shape = 's32[1]{0}', space=sflag, size = 0x4, scoped, tag = 'scoped memory for tpu_custom_call.1']
    #allocation7 [shape = 's32[1]{0}', space=sflag, size = 0x4, scoped, tag = 'scoped memory for tpu_custom_call.1']
    #allocation8 [shape = 'u8[4096]{0}', space=vmem, size = 0x1000, scoped, tag = 'output window, operand 0, single buffered']
    %14 = vsyncpa [#allocation6], 0
    %15 = vsyncpa [#allocation7], 0
    // Predicated region
    $region2: #{tpu_custom_call.1} parent=1 // pred_check
      _
    $region3: #{tpu_custom_call.1} parent=1 // pred_check_branch
      %17 = sbr.rel (0) target = $region5
    $region4: #{tpu_custom_call.1} parent=1 // pred_region
      _
    $region5: #{tpu_custom_call.1} parent=1 // pred_fallthru
      _
    // Predicated region
    $region6: #{tpu_custom_call.1} parent=1 // pred_check
      _
    $region7: #{tpu_custom_call.1} parent=1 // pred_check_branch
      %19 = sbr.rel (0) target = $region9
    $region8: #{tpu_custom_call.1} parent=1 // pred_region
      _
    $region9: #{tpu_custom_call.1} parent=1 // pred_fallthru
      _
    // Predicated region
    $region10: #{tpu_custom_call.1} parent=1 // pred_check
      _
    $region11: #{tpu_custom_call.1} parent=1 // pred_check_branch
      %21 = sbr.rel (0) target = $region13
    $region12: #{tpu_custom_call.1} parent=1 // pred_region
      _
    $region13: #{tpu_custom_call.1} parent=1 // pred_fallthru
      _
    // Predicated region
    $region14: #{tpu_custom_call.1} parent=1 // pred_check
      _
    $region15: #{tpu_custom_call.1} parent=1 // pred_check_branch
      %23 = sbr.rel (0) target = $region17
    $region16: #{tpu_custom_call.1} parent=1 // pred_region
      _
    $region17: #{tpu_custom_call.1} parent=1 // pred_fallthru
      _
    // Predicated region
    $region18: #{tpu_custom_call.1} parent=1 // pred_check
      _
    $region19: #{tpu_custom_call.1} parent=1 // pred_check_branch
      %25 = sbr.rel (0) target = $region21
    $region20: #{tpu_custom_call.1} parent=1 // pred_region
      _
    $region21: #{tpu_custom_call.1} parent=1 // pred_fallthru
      _
    // Predicated region
    $region22: #{tpu_custom_call.1} parent=1 // pred_check
      _
    $region23: #{tpu_custom_call.1} parent=1 // pred_check_branch
      %27 = sbr.rel (0) target = $region25
    $region24: #{tpu_custom_call.1} parent=1 // pred_region
      %s29 = ssub.s32 6144, 6144
      %30 = vsyncadd [#allocation6], %s29
      %s31 = sshll.u32 [#allocation5], 4
      %s32 = int_to_ptr.vmem [resolvable:$true] %s31
      %37 = dma.hbm_to_vmem [thread:$0]  %s5, 6144, %s32, [#allocation6], 128, 128, 8
    $region25: #{tpu_custom_call.1} parent=1 // pred_fallthru
      _
    // Predicated region
    $region26: #{tpu_custom_call.1} parent=1 // pred_check
      _
    $region27: #{tpu_custom_call.1} parent=1 // pred_check_branch
      %39 = sbr.rel (0) target = $region29
    $region28: #{tpu_custom_call.1} parent=1 // pred_region
      _
    $region29: #{tpu_custom_call.1} parent=1 // pred_fallthru
      _
    // Predicated region
    $region30: #{tpu_custom_call.1} parent=1 // pred_check
      _
    $region31: #{tpu_custom_call.1} parent=1 // pred_check_branch
      %41 = sbr.rel (0) target = $region33
    $region32: #{tpu_custom_call.1} parent=1 // pred_region
      _
    $region33: #{tpu_custom_call.1} parent=1 // pred_fallthru
      _
    // Predicated region
    $region34: #{tpu_custom_call.1} parent=1 // pred_check
      _
    $region35: #{tpu_custom_call.1} parent=1 // pred_check_branch
      %43 = sbr.rel (0) target = $region37
    $region36: #{tpu_custom_call.1} parent=1 // pred_region
      _
    $region37: #{tpu_custom_call.1} parent=1 // pred_fallthru
      _
    // Predicated region
    $region38: #{tpu_custom_call.1} parent=1 // pred_check
      _
    $region39: #{tpu_custom_call.1} parent=1 // pred_check_branch
      %45 = sbr.rel (0) target = $region41
    $region40: #{tpu_custom_call.1} parent=1 // pred_region
      %46 = dma.done [#allocation6], 6144
    $region41: #{tpu_custom_call.1} parent=1 // pred_fallthru
      _
    %v48 = vld [vmem:[%s0] sm:$0xff]
    %v49 = vld [vmem:[%s0 + $0x8] sm:$0xff]
    %v50 = vld [vmem:[%s0 + $0x10] sm:$0xff]
    %v51 = vld [vmem:[%s0 + $0x18] sm:$0xff]
    %v52 = vld [vmem:[%s0 + $0x20] sm:$0xff]
    %v53 = vld [vmem:[%s0 + $0x28] sm:$0xff]
    %v54 = vld [vmem:[%s0 + $0x30] sm:$0xff]
    %v55 = vld [vmem:[%s0 + $0x38] sm:$0xff]
    %v56 = vld [vmem:[%s0 + $0x40] sm:$0xff]
    %v57 = vld [vmem:[%s0 + $0x48] sm:$0xff]
    %v58 = vld [vmem:[%s0 + $0x50] sm:$0xff]
    %v59 = vld [vmem:[%s0 + $0x58] sm:$0xff]
    %v60 = vld [vmem:[%s0 + $0x60] sm:$0xff]
    %v61 = vld [vmem:[%s0 + $0x68] sm:$0xff]
    %v62 = vld [vmem:[%s0 + $0x70] sm:$0xff]
    %v63 = vld [vmem:[%s0 + $0x78] sm:$0xff]
    %vm64 = vcmask 31744
    %65 = vst.msk [vmem:[#allocation2 + $0x1] sm:$0xff] %vm64, %v48
    %66 = vst.msk [vmem:[#allocation2 + $0x9] sm:$0xff] %vm64, %v49
    %67 = vst.msk [vmem:[#allocation2 + $0x11] sm:$0xff] %vm64, %v50
    %68 = vst.msk [vmem:[#allocation2 + $0x19] sm:$0xff] %vm64, %v51
    %69 = vst.msk [vmem:[#allocation2 + $0x21] sm:$0xff] %vm64, %v52
    %70 = vst.msk [vmem:[#allocation2 + $0x29] sm:$0xff] %vm64, %v53
    %71 = vst.msk [vmem:[#allocation2 + $0x31] sm:$0xff] %vm64, %v54
    %72 = vst.msk [vmem:[#allocation2 + $0x39] sm:$0xff] %vm64, %v55
    %73 = vst.msk [vmem:[#allocation2 + $0x41] sm:$0xff] %vm64, %v56
    %74 = vst.msk [vmem:[#allocation2 + $0x49] sm:$0xff] %vm64, %v57
    %75 = vst.msk [vmem:[#allocation2 + $0x51] sm:$0xff] %vm64, %v58
    %76 = vst.msk [vmem:[#allocation2 + $0x59] sm:$0xff] %vm64, %v59
    %77 = vst.msk [vmem:[#allocation2 + $0x61] sm:$0xff] %vm64, %v60
    %78 = vst.msk [vmem:[#allocation2 + $0x69] sm:$0xff] %vm64, %v61
    %79 = vst.msk [vmem:[#allocation2 + $0x71] sm:$0xff] %vm64, %v62
    %80 = vst.msk [vmem:[#allocation2 + $0x79] sm:$0xff] %vm64, %v63
    %v81 = vld [vmem:[%s1] sm:$0xf]
    %v82 = vld [vmem:[%s1 + $0x4] sm:$0x3]
    %v83 = vld [vmem:[%s2] sm:$0x1]
    %v84 = vlaneseq
    %v85 = vshrl.u32 %v84, 7
    %v86 = vadd.s32 %v85, 8
    %v87 = vadd.s32 %v85, 16
    %v88 = vadd.s32 %v85, 24
    %v89 = vadd.s32 %v85, 32
    %v90 = vadd.s32 %v85, 40
    %v91 = vadd.s32 %v85, 48
    %v92 = vadd.s32 %v85, 56
    %v93 = vand.u32 %v85, 7
    %v94 = vand.u32 %v86, 7
    %v95 = vand.u32 %v87, 7
    %v96 = vand.u32 %v88, 7
    %v97 = vand.u32 %v89, 7
    %v98 = vand.u32 %v90, 7
    %v99 = vand.u32 %v91, 7
    %v100 = vand.u32 %v92, 7
    %vm101 = vcmp.eq.s32.totalorder %v93, 0
    %vm102 = vcmp.eq.s32.totalorder %v94, 0
    %vm103 = vcmp.eq.s32.totalorder %v95, 0
    %vm104 = vcmp.eq.s32.totalorder %v96, 0
    %vm105 = vcmp.eq.s32.totalorder %v97, 0
    %vm106 = vcmp.eq.s32.totalorder %v98, 0
    %vm107 = vcmp.eq.s32.totalorder %v99, 0
    %vm108 = vcmp.eq.s32.totalorder %v100, 0
    %vm109 = vcmp.eq.s32.totalorder %v93, 7
    %vm110 = vcmp.eq.s32.totalorder %v94, 7
    %vm111 = vcmp.eq.s32.totalorder %v95, 7
    %vm112 = vcmp.eq.s32.totalorder %v96, 7
    %vm113 = vcmp.eq.s32.totalorder %v97, 7
    %vm114 = vcmp.eq.s32.totalorder %v98, 7
    %vm115 = vcmp.eq.s32.totalorder %v99, 7
    %vm116 = vcmp.eq.s32.totalorder %v100, 7
    %v117 = vld [vmem:[#allocation2] ss:$2 sm:$0xff]
    %s118 = scalar_lea.vmem [#allocation2], 16
    %v119 = vld [vmem:[%s118] ss:$2 sm:$0xff]
    %s120 = scalar_lea.vmem [#allocation2], 32
    %v121 = vld [vmem:[%s120] ss:$2 sm:$0xff]
    %s122 = scalar_lea.vmem [#allocation2], 48
    %v123 = vld [vmem:[%s122] ss:$2 sm:$0xff]
    %s124 = scalar_lea.vmem [#allocation2], 64
    %v125 = vld [vmem:[%s124] ss:$2 sm:$0xff]
    %s126 = scalar_lea.vmem [#allocation2], 80
    %v127 = vld [vmem:[%s126] ss:$2 sm:$0xff]
    %s128 = scalar_lea.vmem [#allocation2], 96
    %v129 = vld [vmem:[%s128] ss:$2 sm:$0xff]
    %s130 = scalar_lea.vmem [#allocation2], 112
    %v131 = vld [vmem:[%s130] ss:$2 sm:$0xff]
    %s132 = scalar_lea.vmem [#allocation2], 1
    %v133 = vld [vmem:[%s132] ss:$2 sm:$0xff]
    %s134 = scalar_lea.vmem [#allocation2], 17
    %v135 = vld [vmem:[%s134] ss:$2 sm:$0xff]
    %s136 = scalar_lea.vmem [#allocation2], 33
    %v137 = vld [vmem:[%s136] ss:$2 sm:$0xff]
    %s138 = scalar_lea.vmem [#allocation2], 49
    %v139 = vld [vmem:[%s138] ss:$2 sm:$0xff]
    %s140 = scalar_lea.vmem [#allocation2], 65
    %v141 = vld [vmem:[%s140] ss:$2 sm:$0xff]
    %s142 = scalar_lea.vmem [#allocation2], 81
    %v143 = vld [vmem:[%s142] ss:$2 sm:$0xff]
    %s144 = scalar_lea.vmem [#allocation2], 97
    %v145 = vld [vmem:[%s144] ss:$2 sm:$0xff]
    %s146 = scalar_lea.vmem [#allocation2], 113
    %v147 = vld [vmem:[%s146] ss:$2 sm:$0xff]
    %s148 = scalar_lea.vmem [#allocation2], 2
    %v149 = vld [vmem:[%s148] ss:$2 sm:$0xff]
    %s150 = scalar_lea.vmem [#allocation2], 18
    %v151 = vld [vmem:[%s150] ss:$2 sm:$0xff]
    %s152 = scalar_lea.vmem [#allocation2], 34
    %v153 = vld [vmem:[%s152] ss:$2 sm:$0xff]
    %s154 = scalar_lea.vmem [#allocation2], 50
    %v155 = vld [vmem:[%s154] ss:$2 sm:$0xff]
    %s156 = scalar_lea.vmem [#allocation2], 66
    %v157 = vld [vmem:[%s156] ss:$2 sm:$0xff]
    %s158 = scalar_lea.vmem [#allocation2], 82
    %v159 = vld [vmem:[%s158] ss:$2 sm:$0xff]
    %s160 = scalar_lea.vmem [#allocation2], 98
    %v161 = vld [vmem:[%s160] ss:$2 sm:$0xff]
    %s162 = scalar_lea.vmem [#allocation2], 114
    %v163 = vld [vmem:[%s162] ss:$2 sm:$0xff]
    %v164 = vsel %vm101, 0.0, %v117
    %v165 = vsel %vm102, 0.0, %v119
    %v166 = vsel %vm103, 0.0, %v121
    %v167 = vsel %vm104, 0.0, %v123
    %v168 = vsel %vm105, 0.0, %v125
    %v169 = vsel %vm106, 0.0, %v127
    %v170 = vsel %vm107, 0.0, %v129
    %v171 = vsel %vm108, 0.0, %v131
    %180 = vrot.lane.b32.xlu0 %v133, 4
    %v181 = vpop.permute.xlu0 %180
    %182 = vrot.lane.b32.xlu0 %v135, 4
    %v183 = vpop.permute.xlu0 %182
    %184 = vrot.lane.b32.xlu0 %v137, 4
    %v185 = vpop.permute.xlu0 %184
    %186 = vrot.lane.b32.xlu0 %v139, 4
    %v187 = vpop.permute.xlu0 %186
    %188 = vrot.lane.b32.xlu0 %v141, 4
    %v189 = vpop.permute.xlu0 %188
    %190 = vrot.lane.b32.xlu0 %v143, 4
    %v191 = vpop.permute.xlu0 %190
    %192 = vrot.lane.b32.xlu0 %v145, 4
    %v193 = vpop.permute.xlu0 %192
    %194 = vrot.lane.b32.xlu0 %v147, 4
    %v195 = vpop.permute.xlu0 %194
    %212 = vrot.lane.b32.xlu0 %v149, 8
    %v213 = vpop.permute.xlu0 %212
    %214 = vrot.lane.b32.xlu0 %v151, 8
    %v215 = vpop.permute.xlu0 %214
    %216 = vrot.lane.b32.xlu0 %v153, 8
    %v217 = vpop.permute.xlu0 %216
    %218 = vrot.lane.b32.xlu0 %v155, 8
    %v219 = vpop.permute.xlu0 %218
    %220 = vrot.lane.b32.xlu0 %v157, 8
    %v221 = vpop.permute.xlu0 %220
    %222 = vrot.lane.b32.xlu0 %v159, 8
    %v223 = vpop.permute.xlu0 %222
    %224 = vrot.lane.b32.xlu0 %v161, 8
    %v225 = vpop.permute.xlu0 %224
    %226 = vrot.lane.b32.xlu0 %v163, 8
    %v227 = vpop.permute.xlu0 %226
    %v236 = vsel %vm64, %v164, %v181
    %v237 = vsel %vm64, %v165, %v183
    %v238 = vsel %vm64, %v166, %v185
    %v239 = vsel %vm64, %v167, %v187
    %v240 = vsel %vm64, %v168, %v189
    %v241 = vsel %vm64, %v169, %v191
    %v242 = vsel %vm64, %v170, %v193
    %v243 = vsel %vm64, %v171, %v195
    %vm244 = vcmask 64512
    %v245 = vsel %vm244, %v236, %v213
    %v246 = vsel %vm244, %v237, %v215
    %v247 = vsel %vm244, %v238, %v217
    %v248 = vsel %vm244, %v239, %v219
    %v249 = vsel %vm244, %v240, %v221
    %v250 = vsel %vm244, %v241, %v223
    %v251 = vsel %vm244, %v242, %v225
    %v252 = vsel %vm244, %v243, %v227
    %v253 = vpack.c.bf16 %v246, %v245
    %v254 = vpack.c.bf16 %v248, %v247
    %v255 = vpack.c.bf16 %v250, %v249
    %v256 = vpack.c.bf16 %v252, %v251
    %v258 = vlaneseq
    %v259 = vshrl.u32 %v258, 7
    %v260 = vsub.s32 0, %v259
    %v261 = vrot.slane %v83, %v260
    %v265 = vunpack.c.l.b16 %v81
    %v266 = vunpack.c.l.b16 %v82
    %v267 = vpack.c.b16 %v266, %v265
    %vm268 = vcmask 97280
    %v270 = vsel %vm268, %v253, 0
    %v273 = vsel %vm268, %v254, 0
    %v276 = vsel %vm268, %v255, 0
    %v279 = vsel %vm268, %v256, 0
    %vm281 = vcmask 1045504
    %v283 = vsel %vm281, %v267, 0
    %285 = vmatprep.subr.bf16.mxu0 0
    %286 = vmatpush1.bf16.msra.mxu0 0
    %287 = vmatprep.subr.bf16.mxu0 0
    %288 = vmatpush1.bf16.msra.mxu0 0
    %289 = vmatprep.subr.bf16.mxu0 0
    %290 = vmatpush1.bf16.msra.mxu0 0
    %291 = vmatprep.subr.bf16.mxu0 0
    %292 = vmatpush1.bf16.msra.mxu0 0
    %293 = vmatprep.subr.bf16.mxu0 0
    %294 = vmatpush1.bf16.msra.mxu0 0
    %295 = vmatprep.subr.bf16.mxu0 0
    %296 = vmatpush1.bf16.msra.mxu0 0
    %297 = vmatprep.subr.bf16.mxu0 0
    %298 = vmatpush1.bf16.msra.mxu0 0
    %299 = vmatprep.subr.bf16.mxu0 0
    %300 = vmatpush1.bf16.msra.mxu0 %v283
    %301 = vmatprep.subr.bf16.mxu0 0
    %302 = vmatpush2.bf16.msra.mxu0 0
    %303 = vmatprep.subr.bf16.mxu0 0
    %304 = vmatpush2.bf16.msra.mxu0 0
    %305 = vmatprep.subr.bf16.mxu0 0
    %306 = vmatpush2.bf16.msra.mxu0 0
    %307 = vmatprep.subr.bf16.mxu0 0
    %308 = vmatpush2.bf16.msra.mxu0 0
    %309 = vmatprep.subr.bf16.mxu0 0
    %310 = vmatpush2.bf16.msra.mxu0 0
    %311 = vmatprep.subr.bf16.mxu0 0
    %312 = vmatpush2.bf16.msra.mxu0 0
    %313 = vmatprep.subr.bf16.mxu0 0
    %314 = vmatpush2.bf16.msra.mxu0 0
    %315 = vmatprep.subr.bf16.mxu0 0
    %316 = vmatpush2.bf16.msra.mxu0 0
    %317 = vmatprep.mubr.bf16.mxu0 0
    %318 = vmatmul.mubr.bf16.gmra.mxu0 %v270
    %v319 = vpop.f32.mrf.mxu0
    %v320 = vadd.f32 %v261, %v319
    %v321 = vpop.f32.mrf.mxu0
    %v322 = vpop.f32.mrf.mxu0
    %v323 = vadd.f32 %v261, %v322
    %v324 = vpop.f32.mrf.mxu0
    %325 = vmatprep.mubr.bf16.mxu0 0
    %326 = vmatmul.mubr.bf16.gmra.mxu0 %v273
    %v327 = vpop.f32.mrf.mxu0
    %v328 = vadd.f32 %v261, %v327
    %v329 = vpop.f32.mrf.mxu0
    %v330 = vpop.f32.mrf.mxu0
    %v331 = vadd.f32 %v261, %v330
    %v332 = vpop.f32.mrf.mxu0
    %333 = vmatprep.mubr.bf16.mxu0 0
    %334 = vmatmul.mubr.bf16.gmra.mxu0 %v276
    %v335 = vpop.f32.mrf.mxu0
    %v336 = vadd.f32 %v261, %v335
    %v337 = vpop.f32.mrf.mxu0
    %v338 = vpop.f32.mrf.mxu0
    %v339 = vadd.f32 %v261, %v338
    %v340 = vpop.f32.mrf.mxu0
    %341 = vmatprep.mubr.bf16.mxu0 0
    %342 = vmatmul.mubr.bf16.gmra.mxu0 %v279
    %v343 = vpop.f32.mrf.mxu0
    %v344 = vadd.f32 %v261, %v343
    %v345 = vpop.f32.mrf.mxu0
    %v346 = vpop.f32.mrf.mxu0
    %v347 = vadd.f32 %v261, %v346
    %v348 = vpop.f32.mrf.mxu0
    %349 = vdwg.mxu0
    %v350 = vmax.f32 %v320, 0.0
    %v351 = vmax.f32 %v323, 0.0
    %v352 = vmax.f32 %v328, 0.0
    %v353 = vmax.f32 %v331, 0.0
    %v354 = vmax.f32 %v336, 0.0
    %v355 = vmax.f32 %v339, 0.0
    %v356 = vmax.f32 %v344, 0.0
    %v357 = vmax.f32 %v347, 0.0
    %s358 = scalar_lea.vmem [#allocation2], 3
    %v359 = vld [vmem:[%s358] ss:$2 sm:$0xff]
    %s360 = scalar_lea.vmem [#allocation2], 19
    %v361 = vld [vmem:[%s360] ss:$2 sm:$0xff]
    %s362 = scalar_lea.vmem [#allocation2], 35
    %v363 = vld [vmem:[%s362] ss:$2 sm:$0xff]
    %s364 = scalar_lea.vmem [#allocation2], 51
    %v365 = vld [vmem:[%s364] ss:$2 sm:$0xff]
    %s366 = scalar_lea.vmem [#allocation2], 67
    %v367 = vld [vmem:[%s366] ss:$2 sm:$0xff]
    %s368 = scalar_lea.vmem [#allocation2], 83
    %v369 = vld [vmem:[%s368] ss:$2 sm:$0xff]
    %s370 = scalar_lea.vmem [#allocation2], 99
    %v371 = vld [vmem:[%s370] ss:$2 sm:$0xff]
    %s372 = scalar_lea.vmem [#allocation2], 115
    %v373 = vld [vmem:[%s372] ss:$2 sm:$0xff]
    %v374 = vsel %vm109, 0.0, %v359
    %v375 = vsel %vm110, 0.0, %v361
    %v376 = vsel %vm111, 0.0, %v363
    %v377 = vsel %vm112, 0.0, %v365
    %v378 = vsel %vm113, 0.0, %v367
    %v379 = vsel %vm114, 0.0, %v369
    %v380 = vsel %vm115, 0.0, %v371
    %v381 = vsel %vm116, 0.0, %v373
    %382 = vrot.lane.b32.xlu0 %v149, 4
    %v383 = vpop.permute.xlu0 %382
    %384 = vrot.lane.b32.xlu0 %v151, 4
    %v385 = vpop.permute.xlu0 %384
    %386 = vrot.lane.b32.xlu0 %v153, 4
    %v387 = vpop.permute.xlu0 %386
    %388 = vrot.lane.b32.xlu0 %v155, 4
    %v389 = vpop.permute.xlu0 %388
    %390 = vrot.lane.b32.xlu0 %v157, 4
    %v391 = vpop.permute.xlu0 %390
    %392 = vrot.lane.b32.xlu0 %v159, 4
    %v393 = vpop.permute.xlu0 %392
    %394 = vrot.lane.b32.xlu0 %v161, 4
    %v395 = vpop.permute.xlu0 %394
    %396 = vrot.lane.b32.xlu0 %v163, 4
    %v397 = vpop.permute.xlu0 %396
    %414 = vrot.lane.b32.xlu0 %v374, 8
    %v415 = vpop.permute.xlu0 %414
    %416 = vrot.lane.b32.xlu0 %v375, 8
    %v417 = vpop.permute.xlu0 %416
    %418 = vrot.lane.b32.xlu0 %v376, 8
    %v419 = vpop.permute.xlu0 %418
    %420 = vrot.lane.b32.xlu0 %v377, 8
    %v421 = vpop.permute.xlu0 %420
    %422 = vrot.lane.b32.xlu0 %v378, 8
    %v423 = vpop.permute.xlu0 %422
    %424 = vrot.lane.b32.xlu0 %v379, 8
    %v425 = vpop.permute.xlu0 %424
    %426 = vrot.lane.b32.xlu0 %v380, 8
    %v427 = vpop.permute.xlu0 %426
    %428 = vrot.lane.b32.xlu0 %v381, 8
    %v429 = vpop.permute.xlu0 %428
    %v438 = vsel %vm64, %v133, %v383
    %v439 = vsel %vm64, %v135, %v385
    %v440 = vsel %vm64, %v137, %v387
    %v441 = vsel %vm64, %v139, %v389
    %v442 = vsel %vm64, %v141, %v391
    %v443 = vsel %vm64, %v143, %v393
    %v444 = vsel %vm64, %v145, %v395
    %v445 = vsel %vm64, %v147, %v397
    %v446 = vsel %vm244, %v438, %v415
    %v447 = vsel %vm244, %v439, %v417
    %v448 = vsel %vm244, %v440, %v419
    %v449 = vsel %vm244, %v441, %v421
    %v450 = vsel %vm244, %v442, %v423
    %v451 = vsel %vm244, %v443, %v425
    %v452 = vsel %vm244, %v444, %v427
    %v453 = vsel %vm244, %v445, %v429
    %v454 = vpack.c.bf16 %v447, %v446
    %v455 = vpack.c.bf16 %v449, %v448
    %v456 = vpack.c.bf16 %v451, %v450
    %v457 = vpack.c.bf16 %v453, %v452
    %v459 = vsel %vm268, %v454, 0
    %v462 = vsel %vm268, %v455, 0
    %v465 = vsel %vm268, %v456, 0
    %v468 = vsel %vm268, %v457, 0
    %470 = vmatprep.subr.bf16.mxu0 0
    %471 = vmatpush1.bf16.msra.mxu0 0
    %472 = vmatprep.subr.bf16.mxu0 0
    %473 = vmatpush1.bf16.msra.mxu0 0
    %474 = vmatprep.subr.bf16.mxu0 0
    %475 = vmatpush1.bf16.msra.mxu0 0
    %476 = vmatprep.subr.bf16.mxu0 0
    %477 = vmatpush1.bf16.msra.mxu0 0
    %478 = vmatprep.subr.bf16.mxu0 0
    %479 = vmatpush1.bf16.msra.mxu0 0
    %480 = vmatprep.subr.bf16.mxu0 0
    %481 = vmatpush1.bf16.msra.mxu0 0
    %482 = vmatprep.subr.bf16.mxu0 0
    %483 = vmatpush1.bf16.msra.mxu0 0
    %484 = vmatprep.subr.bf16.mxu0 0
    %485 = vmatpush1.bf16.msra.mxu0 %v283
    %486 = vmatprep.subr.bf16.mxu0 0
    %487 = vmatpush2.bf16.msra.mxu0 0
    %488 = vmatprep.subr.bf16.mxu0 0
    %489 = vmatpush2.bf16.msra.mxu0 0
    %490 = vmatprep.subr.bf16.mxu0 0
    %491 = vmatpush2.bf16.msra.mxu0 0
    %492 = vmatprep.subr.bf16.mxu0 0
    %493 = vmatpush2.bf16.msra.mxu0 0
    %494 = vmatprep.subr.bf16.mxu0 0
    %495 = vmatpush2.bf16.msra.mxu0 0
    %496 = vmatprep.subr.bf16.mxu0 0
    %497 = vmatpush2.bf16.msra.mxu0 0
    %498 = vmatprep.subr.bf16.mxu0 0
    %499 = vmatpush2.bf16.msra.mxu0 0
    %500 = vmatprep.subr.bf16.mxu0 0
    %501 = vmatpush2.bf16.msra.mxu0 0
    %502 = vmatprep.mubr.bf16.mxu0 0
    %503 = vmatmul.mubr.bf16.gmra.mxu0 %v459
    %v504 = vpop.f32.mrf.mxu0
    %v505 = vadd.f32 %v261, %v504
    %v506 = vpop.f32.mrf.mxu0
    %v507 = vpop.f32.mrf.mxu0
    %v508 = vadd.f32 %v261, %v507
    %v509 = vpop.f32.mrf.mxu0
    %510 = vmatprep.mubr.bf16.mxu0 0
    %511 = vmatmul.mubr.bf16.gmra.mxu0 %v462
    %v512 = vpop.f32.mrf.mxu0
    %v513 = vadd.f32 %v261, %v512
    %v514 = vpop.f32.mrf.mxu0
    %v515 = vpop.f32.mrf.mxu0
    %v516 = vadd.f32 %v261, %v515
    %v517 = vpop.f32.mrf.mxu0
    %518 = vmatprep.mubr.bf16.mxu0 0
    %519 = vmatmul.mubr.bf16.gmra.mxu0 %v465
    %v520 = vpop.f32.mrf.mxu0
    %v521 = vadd.f32 %v261, %v520
    %v522 = vpop.f32.mrf.mxu0
    %v523 = vpop.f32.mrf.mxu0
    %v524 = vadd.f32 %v261, %v523
    %v525 = vpop.f32.mrf.mxu0
    %526 = vmatprep.mubr.bf16.mxu0 0
    %527 = vmatmul.mubr.bf16.gmra.mxu0 %v468
    %v528 = vpop.f32.mrf.mxu0
    %v529 = vadd.f32 %v261, %v528
    %v530 = vpop.f32.mrf.mxu0
    %v531 = vpop.f32.mrf.mxu0
    %v532 = vadd.f32 %v261, %v531
    %v533 = vpop.f32.mrf.mxu0
    %534 = vdwg.mxu0
    %v535 = vmax.f32 %v505, 0.0
    %v536 = vmax.f32 %v508, 0.0
    %v537 = vmax.f32 %v513, 0.0
    %v538 = vmax.f32 %v516, 0.0
    %v539 = vmax.f32 %v521, 0.0
    %v540 = vmax.f32 %v524, 0.0
    %v541 = vmax.f32 %v529, 0.0
    %v542 = vmax.f32 %v532, 0.0
    %v543 = vmax.f32 %v350, %v535
    %v544 = vmax.f32 %v351, %v536
    %v545 = vmax.f32 %v352, %v537
    %v546 = vmax.f32 %v353, %v538
    %v547 = vmax.f32 %v354, %v539
    %v548 = vmax.f32 %v355, %v540
    %v549 = vmax.f32 %v356, %v541
    %v550 = vmax.f32 %v357, %v542
    %vm551 = vcmask 523264
    %552 = vst.msk [vmem:[#allocation3 + $0x1] sm:$0xff] %vm551, %v543
    %553 = vst.msk [vmem:[#allocation3 + $0x9] sm:$0xff] %vm551, %v544
    %554 = vst.msk [vmem:[#allocation3 + $0x11] sm:$0xff] %vm551, %v545
    %555 = vst.msk [vmem:[#allocation3 + $0x19] sm:$0xff] %vm551, %v546
    %556 = vst.msk [vmem:[#allocation3 + $0x21] sm:$0xff] %vm551, %v547
    %557 = vst.msk [vmem:[#allocation3 + $0x29] sm:$0xff] %vm551, %v548
    %558 = vst.msk [vmem:[#allocation3 + $0x31] sm:$0xff] %vm551, %v549
    %559 = vst.msk [vmem:[#allocation3 + $0x39] sm:$0xff] %vm551, %v550
    %v560 = vld [vmem:[%s3] sm:$0xf]
    %v561 = vld [vmem:[%s3 + $0x4] sm:$0xf]
    %v562 = vld [vmem:[%s3 + $0x8] sm:$0xf]
    %v563 = vld [vmem:[%s3 + $0xc] sm:$0xf]
    %v564 = vld [vmem:[%s3 + $0x10] sm:$0xf]
    %v565 = vld [vmem:[%s3 + $0x14] sm:$0xf]
    %v566 = vld [vmem:[%s3 + $0x18] sm:$0xf]
    %v567 = vld [vmem:[%s3 + $0x1c] sm:$0xf]
    %v568 = vld [vmem:[%s3 + $0x20] sm:$0xf]
    %v569 = vld [vmem:[%s3 + $0x24] sm:$0xf]
    %v570 = vld [vmem:[%s3 + $0x28] sm:$0xf]
    %v571 = vld [vmem:[%s3 + $0x2c] sm:$0xf]
    %v572 = vld [vmem:[%s3 + $0x30] sm:$0xf]
    %v573 = vld [vmem:[%s3 + $0x34] sm:$0xf]
    %v574 = vld [vmem:[%s3 + $0x38] sm:$0xf]
    %v575 = vld [vmem:[%s3 + $0x3c] sm:$0xf]
    %v576 = vld [vmem:[%s3 + $0x40] sm:$0xf]
    %v577 = vld [vmem:[%s3 + $0x44] sm:$0xf]
    %v578 = vld [vmem:[%s3 + $0x48] sm:$0xf]
    %v579 = vld [vmem:[%s3 + $0x4c] sm:$0xf]
    %v580 = vld [vmem:[%s3 + $0x50] sm:$0xf]
    %v581 = vld [vmem:[%s3 + $0x54] sm:$0xf]
    %v582 = vld [vmem:[%s3 + $0x58] sm:$0xf]
    %v583 = vld [vmem:[%s3 + $0x5c] sm:$0xf]
    %v584 = vld [vmem:[%s4] sm:$0x1]
    %v585 = vand.u32 %v85, 3
    %v586 = vand.u32 %v86, 3
    %v587 = vand.u32 %v87, 3
    %v588 = vand.u32 %v88, 3
    %vm589 = vcmp.eq.s32.totalorder %v585, 0
    %vm590 = vcmp.eq.s32.totalorder %v586, 0
    %vm591 = vcmp.eq.s32.totalorder %v587, 0
    %vm592 = vcmp.eq.s32.totalorder %v588, 0
    %vm593 = vcmp.eq.s32.totalorder %v585, 3
    %vm594 = vcmp.eq.s32.totalorder %v586, 3
    %vm595 = vcmp.eq.s32.totalorder %v587, 3
    %vm596 = vcmp.eq.s32.totalorder %v588, 3
    %v597 = vld [vmem:[#allocation3] ss:$2 sm:$0xff]
    %s598 = scalar_lea.vmem [#allocation3], 16
    %v599 = vld [vmem:[%s598] ss:$2 sm:$0xff]
    %s600 = scalar_lea.vmem [#allocation3], 32
    %v601 = vld [vmem:[%s600] ss:$2 sm:$0xff]
    %s602 = scalar_lea.vmem [#allocation3], 48
    %v603 = vld [vmem:[%s602] ss:$2 sm:$0xff]
    %s604 = scalar_lea.vmem [#allocation3], 1
    %v605 = vld [vmem:[%s604] ss:$2 sm:$0xff]
    %s606 = scalar_lea.vmem [#allocation3], 17
    %v607 = vld [vmem:[%s606] ss:$2 sm:$0xff]
    %s608 = scalar_lea.vmem [#allocation3], 33
    %v609 = vld [vmem:[%s608] ss:$2 sm:$0xff]
    %s610 = scalar_lea.vmem [#allocation3], 49
    %v611 = vld [vmem:[%s610] ss:$2 sm:$0xff]
    %s612 = scalar_lea.vmem [#allocation3], 2
    %v613 = vld [vmem:[%s612] ss:$2 sm:$0xff]
    %s614 = scalar_lea.vmem [#allocation3], 18
    %v615 = vld [vmem:[%s614] ss:$2 sm:$0xff]
    %s616 = scalar_lea.vmem [#allocation3], 34
    %v617 = vld [vmem:[%s616] ss:$2 sm:$0xff]
    %s618 = scalar_lea.vmem [#allocation3], 50
    %v619 = vld [vmem:[%s618] ss:$2 sm:$0xff]
    %v620 = vsel %vm589, 0.0, %v597
    %v621 = vsel %vm590, 0.0, %v599
    %v622 = vsel %vm591, 0.0, %v601
    %v623 = vsel %vm592, 0.0, %v603
    %628 = vrot.lane.b32.xlu0 %v605, 64
    %v629 = vpop.permute.xlu0 %628
    %630 = vrot.lane.b32.xlu0 %v607, 64
    %v631 = vpop.permute.xlu0 %630
    %632 = vrot.lane.b32.xlu0 %v609, 64
    %v633 = vpop.permute.xlu0 %632
    %634 = vrot.lane.b32.xlu0 %v611, 64
    %v635 = vpop.permute.xlu0 %634
    %v640 = vsel %vm551, %v620, %v629
    %v641 = vsel %vm551, %v621, %v631
    %v642 = vsel %vm551, %v622, %v633
    %v643 = vsel %vm551, %v623, %v635
    %v644 = vpack.c.bf16 %v641, %v640
    %v645 = vpack.c.bf16 %v615, %v613
    %v646 = vpack.c.bf16 %v643, %v642
    %v647 = vpack.c.bf16 %v619, %v617
    %v649 = vlaneseq
    %v650 = vshrl.u32 %v649, 7
    %v651 = vsub.s32 0, %v650
    %v652 = vrot.slane %v584, %v651
    %v678 = vunpack.c.l.b16 %v560
    %v679 = vunpack.c.l.b16 %v561
    %v680 = vunpack.c.l.b16 %v562
    %v681 = vunpack.c.l.b16 %v563
    %v682 = vunpack.c.l.b16 %v564
    %v683 = vunpack.c.l.b16 %v565
    %v684 = vunpack.c.l.b16 %v566
    %v685 = vunpack.c.l.b16 %v567
    %v686 = vunpack.c.l.b16 %v568
    %v687 = vunpack.c.l.b16 %v569
    %v688 = vunpack.c.l.b16 %v570
    %v689 = vunpack.c.l.b16 %v571
    %v690 = vunpack.c.l.b16 %v572
    %v691 = vunpack.c.l.b16 %v573
    %v692 = vunpack.c.l.b16 %v574
    %v693 = vunpack.c.l.b16 %v575
    %v694 = vunpack.c.l.b16 %v576
    %v695 = vunpack.c.l.b16 %v577
    %v696 = vunpack.c.l.b16 %v578
    %v697 = vunpack.c.l.b16 %v579
    %v698 = vunpack.c.l.b16 %v580
    %v699 = vunpack.c.l.b16 %v581
    %v700 = vunpack.c.l.b16 %v582
    %v701 = vunpack.c.l.b16 %v583
    %v702 = vpack.c.b16 %v679, %v678
    %v703 = vpack.c.b16 %v681, %v680
    %v704 = vpack.c.b16 %v683, %v682
    %v705 = vpack.c.b16 %v685, %v684
    %v706 = vpack.c.b16 %v687, %v686
    %v707 = vpack.c.b16 %v689, %v688
    %v708 = vpack.c.b16 %v691, %v690
    %v709 = vpack.c.b16 %v693, %v692
    %v710 = vpack.c.b16 %v695, %v694
    %v711 = vpack.c.b16 %v697, %v696
    %v712 = vpack.c.b16 %v699, %v698
    %v713 = vpack.c.b16 %v701, %v700
    %v727 = vsel %vm551, %v645, 0
    %v730 = vsel %vm551, %v647, 0
    %732 = vmatprep.subr.bf16.mxu0 0
    %733 = vmatpush1.bf16.msra.mxu0 %v709
    %734 = vmatprep.subr.bf16.mxu0 0
    %735 = vmatpush1.bf16.msra.mxu0 %v708
    %736 = vmatprep.subr.bf16.mxu0 0
    %737 = vmatpush1.bf16.msra.mxu0 %v707
    %738 = vmatprep.subr.bf16.mxu0 0
    %739 = vmatpush1.bf16.msra.mxu0 %v706
    %740 = vmatprep.subr.bf16.mxu0 0
    %741 = vmatpush1.bf16.msra.mxu0 %v705
    %742 = vmatprep.subr.bf16.mxu0 0
    %743 = vmatpush1.bf16.msra.mxu0 %v704
    %744 = vmatprep.subr.bf16.mxu0 0
    %745 = vmatpush1.bf16.msra.mxu0 %v703
    %746 = vmatprep.subr.bf16.mxu0 0
    %747 = vmatpush1.bf16.msra.mxu0 %v702
    %748 = vmatprep.subr.bf16.mxu0 0
    %749 = vmatpush2.bf16.msra.mxu0 0
    %750 = vmatprep.subr.bf16.mxu0 0
    %751 = vmatpush2.bf16.msra.mxu0 0
    %752 = vmatprep.subr.bf16.mxu0 0
    %753 = vmatpush2.bf16.msra.mxu0 0
    %754 = vmatprep.subr.bf16.mxu0 0
    %755 = vmatpush2.bf16.msra.mxu0 0
    %756 = vmatprep.subr.bf16.mxu0 0
    %757 = vmatpush2.bf16.msra.mxu0 %v713
    %758 = vmatprep.subr.bf16.mxu0 0
    %759 = vmatpush2.bf16.msra.mxu0 %v712
    %760 = vmatprep.subr.bf16.mxu0 0
    %761 = vmatpush2.bf16.msra.mxu0 %v711
    %762 = vmatprep.subr.bf16.mxu0 0
    %763 = vmatpush2.bf16.msra.mxu0 %v710
    %764 = vmatprep.mubr.bf16.mxu0 %v727
    %765 = vmatmul.mubr.bf16.gmra.mxu0 %v644
    %v766 = vpop.f32.mrf.mxu0
    %v767 = vadd.f32 %v652, %v766
    %v768 = vpop.f32.mrf.mxu0
    %v769 = vpop.f32.mrf.mxu0
    %v770 = vadd.f32 %v652, %v769
    %v771 = vpop.f32.mrf.mxu0
    %772 = vmatprep.mubr.bf16.mxu0 %v730
    %773 = vmatmul.mubr.bf16.gmra.mxu0 %v646
    %v774 = vpop.f32.mrf.mxu0
    %v775 = vadd.f32 %v652, %v774
    %v776 = vpop.f32.mrf.mxu0
    %v777 = vpop.f32.mrf.mxu0
    %v778 = vadd.f32 %v652, %v777
    %v779 = vpop.f32.mrf.mxu0
    %780 = vdwg.mxu0
    %v781 = vmax.f32 %v767, 0.0
    %v782 = vmax.f32 %v770, 0.0
    %v783 = vmax.f32 %v775, 0.0
    %v784 = vmax.f32 %v778, 0.0
    %s785 = scalar_lea.vmem [#allocation3], 3
    %v786 = vld [vmem:[%s785] ss:$2 sm:$0xff]
    %s787 = scalar_lea.vmem [#allocation3], 19
    %v788 = vld [vmem:[%s787] ss:$2 sm:$0xff]
    %s789 = scalar_lea.vmem [#allocation3], 35
    %v790 = vld [vmem:[%s789] ss:$2 sm:$0xff]
    %s791 = scalar_lea.vmem [#allocation3], 51
    %v792 = vld [vmem:[%s791] ss:$2 sm:$0xff]
    %v793 = vsel %vm593, 0.0, %v786
    %v794 = vsel %vm594, 0.0, %v788
    %v795 = vsel %vm595, 0.0, %v790
    %v796 = vsel %vm596, 0.0, %v792
    %801 = vrot.lane.b32.xlu0 %v613, 64
    %v802 = vpop.permute.xlu0 %801
    %803 = vrot.lane.b32.xlu0 %v615, 64
    %v804 = vpop.permute.xlu0 %803
    %805 = vrot.lane.b32.xlu0 %v617, 64
    %v806 = vpop.permute.xlu0 %805
    %807 = vrot.lane.b32.xlu0 %v619, 64
    %v808 = vpop.permute.xlu0 %807
    %v813 = vsel %vm551, %v605, %v802
    %v814 = vsel %vm551, %v607, %v804
    %v815 = vsel %vm551, %v609, %v806
    %v816 = vsel %vm551, %v611, %v808
    %v817 = vpack.c.bf16 %v814, %v813
    %v818 = vpack.c.bf16 %v794, %v793
    %v819 = vpack.c.bf16 %v816, %v815
    %v820 = vpack.c.bf16 %v796, %v795
    %v822 = vsel %vm551, %v818, 0
    %v825 = vsel %vm551, %v820, 0
    %827 = vmatprep.subr.bf16.mxu0 0
    %828 = vmatpush1.bf16.msra.mxu0 %v709
    %829 = vmatprep.subr.bf16.mxu0 0
    %830 = vmatpush1.bf16.msra.mxu0 %v708
    %831 = vmatprep.subr.bf16.mxu0 0
    %832 = vmatpush1.bf16.msra.mxu0 %v707
    %833 = vmatprep.subr.bf16.mxu0 0
    %834 = vmatpush1.bf16.msra.mxu0 %v706
    %835 = vmatprep.subr.bf16.mxu0 0
    %836 = vmatpush1.bf16.msra.mxu0 %v705
    %837 = vmatprep.subr.bf16.mxu0 0
    %838 = vmatpush1.bf16.msra.mxu0 %v704
    %839 = vmatprep.subr.bf16.mxu0 0
    %840 = vmatpush1.bf16.msra.mxu0 %v703
    %841 = vmatprep.subr.bf16.mxu0 0
    %842 = vmatpush1.bf16.msra.mxu0 %v702
    %843 = vmatprep.subr.bf16.mxu0 0
    %844 = vmatpush2.bf16.msra.mxu0 0
    %845 = vmatprep.subr.bf16.mxu0 0
    %846 = vmatpush2.bf16.msra.mxu0 0
    %847 = vmatprep.subr.bf16.mxu0 0
    %848 = vmatpush2.bf16.msra.mxu0 0
    %849 = vmatprep.subr.bf16.mxu0 0
    %850 = vmatpush2.bf16.msra.mxu0 0
    %851 = vmatprep.subr.bf16.mxu0 0
    %852 = vmatpush2.bf16.msra.mxu0 %v713
    %853 = vmatprep.subr.bf16.mxu0 0
    %854 = vmatpush2.bf16.msra.mxu0 %v712
    %855 = vmatprep.subr.bf16.mxu0 0
    %856 = vmatpush2.bf16.msra.mxu0 %v711
    %857 = vmatprep.subr.bf16.mxu0 0
    %858 = vmatpush2.bf16.msra.mxu0 %v710
    %859 = vmatprep.mubr.bf16.mxu0 %v822
    %860 = vmatmul.mubr.bf16.gmra.mxu0 %v817
    %v861 = vpop.f32.mrf.mxu0
    %v862 = vadd.f32 %v652, %v861
    %v863 = vpop.f32.mrf.mxu0
    %v864 = vpop.f32.mrf.mxu0
    %v865 = vadd.f32 %v652, %v864
    %v866 = vpop.f32.mrf.mxu0
    %867 = vmatprep.mubr.bf16.mxu0 %v825
    %868 = vmatmul.mubr.bf16.gmra.mxu0 %v819
    %v869 = vpop.f32.mrf.mxu0
    %v870 = vadd.f32 %v652, %v869
    %v871 = vpop.f32.mrf.mxu0
    %v872 = vpop.f32.mrf.mxu0
    %v873 = vadd.f32 %v652, %v872
    %v874 = vpop.f32.mrf.mxu0
    %875 = vdwg.mxu0
    %v876 = vmax.f32 %v862, 0.0
    %v877 = vmax.f32 %v865, 0.0
    %v878 = vmax.f32 %v870, 0.0
    %v879 = vmax.f32 %v873, 0.0
    %v880 = vmax.f32 %v781, %v876
    %v881 = vmax.f32 %v782, %v877
    %v882 = vmax.f32 %v783, %v878
    %v883 = vmax.f32 %v784, %v879
    %884 = vst [vmem:[#allocation4 + $0x1] sm:$0xff] %v880
    %885 = vst [vmem:[#allocation4 + $0x9] sm:$0xff] %v881
    %886 = vst [vmem:[#allocation4 + $0x11] sm:$0xff] %v882
    %887 = vst [vmem:[#allocation4 + $0x19] sm:$0xff] %v883
    %v888 = vld [vmem:[#allocation5] sm:$0xff]
    %v889 = vld [vmem:[#allocation5 + $0x8] sm:$0xff]
    %v890 = vld [vmem:[#allocation5 + $0x10] sm:$0xff]
    %v891 = vld [vmem:[#allocation5 + $0x18] sm:$0xff]
    %v892 = vld [vmem:[#allocation5 + $0x20] sm:$0xff]
    %v893 = vld [vmem:[#allocation5 + $0x28] sm:$0xff]
    %v894 = vld [vmem:[#allocation5 + $0x30] sm:$0xff]
    %v895 = vld [vmem:[#allocation5 + $0x38] sm:$0xff]
    %v896 = vld [vmem:[#allocation5 + $0x40] sm:$0xff]
    %v897 = vld [vmem:[#allocation5 + $0x48] sm:$0xff]
    %v898 = vld [vmem:[#allocation5 + $0x50] sm:$0xff]
    %v899 = vld [vmem:[#allocation5 + $0x58] sm:$0xff]
    %v900 = vld [vmem:[#allocation5 + $0x60] sm:$0xff]
    %v901 = vld [vmem:[#allocation5 + $0x68] sm:$0xff]
    %v902 = vld [vmem:[#allocation5 + $0x70] sm:$0xff]
    %v903 = vld [vmem:[#allocation5 + $0x78] sm:$0xff]
    %v904 = vld [vmem:[#allocation5 + $0x80] sm:$0xff]
    %v905 = vld [vmem:[#allocation5 + $0x88] sm:$0xff]
    %v906 = vld [vmem:[#allocation5 + $0x90] sm:$0xff]
    %v907 = vld [vmem:[#allocation5 + $0x98] sm:$0xff]
    %v908 = vld [vmem:[#allocation5 + $0xa0] sm:$0xff]
    %v909 = vld [vmem:[#allocation5 + $0xa8] sm:$0xff]
    %v910 = vld [vmem:[#allocation5 + $0xb0] sm:$0xff]
    %v911 = vld [vmem:[#allocation5 + $0xb8] sm:$0xff]
    %v912 = vld [vmem:[#allocation5 + $0xc0] sm:$0xff]
    %v913 = vld [vmem:[#allocation5 + $0xc8] sm:$0xff]
    %v914 = vld [vmem:[#allocation5 + $0xd0] sm:$0xff]
    %v915 = vld [vmem:[#allocation5 + $0xd8] sm:$0xff]
    %v916 = vld [vmem:[#allocation5 + $0xe0] sm:$0xff]
    %v917 = vld [vmem:[#allocation5 + $0xe8] sm:$0xff]
    %v918 = vld [vmem:[#allocation5 + $0xf0] sm:$0xff]
    %v919 = vld [vmem:[#allocation5 + $0xf8] sm:$0xff]
    %v920 = vld [vmem:[#allocation5 + $0x100] sm:$0xff]
    %v921 = vld [vmem:[#allocation5 + $0x108] sm:$0xff]
    %v922 = vld [vmem:[#allocation5 + $0x110] sm:$0xff]
    %v923 = vld [vmem:[#allocation5 + $0x118] sm:$0xff]
    %v924 = vld [vmem:[#allocation5 + $0x120] sm:$0xff]
    %v925 = vld [vmem:[#allocation5 + $0x128] sm:$0xff]
    %v926 = vld [vmem:[#allocation5 + $0x130] sm:$0xff]
    %v927 = vld [vmem:[#allocation5 + $0x138] sm:$0xff]
    %v928 = vld [vmem:[#allocation5 + $0x140] sm:$0xff]
    %v929 = vld [vmem:[#allocation5 + $0x148] sm:$0xff]
    %v930 = vld [vmem:[#allocation5 + $0x150] sm:$0xff]
    %v931 = vld [vmem:[#allocation5 + $0x158] sm:$0xff]
    %v932 = vld [vmem:[#allocation5 + $0x160] sm:$0xff]
    %v933 = vld [vmem:[#allocation5 + $0x168] sm:$0xff]
    %v934 = vld [vmem:[#allocation5 + $0x170] sm:$0xff]
    %v935 = vld [vmem:[#allocation5 + $0x178] sm:$0xff]
    %v936 = vld [vmem:[%s6] sm:$0x3]
    %s937 = scalar_lea.vmem [#allocation4], 1
    %v938 = vld [vmem:[%s937] ss:$4 sm:$0xff]
    %s939 = scalar_lea.vmem [#allocation4], 2
    %v940 = vld [vmem:[%s939] ss:$4 sm:$0xff]
    %v941 = vpack.c.bf16 0.0, 0.0
    %v942 = vpack.c.bf16 %v938, %v938
    %v943 = vpack.c.bf16 %v940, %v940
    %v945 = vlaneseq
    %v946 = vshrl.u32 %v945, 7
    %v947 = vsub.s32 0, %v946
    %v948 = vrot.slane %v936, %v947
    %v949 = vlaneseq
    %v950 = vshrl.u32 %v949, 7
    %v951 = vsub.s32 1, %v950
    %v952 = vrot.slane %v936, %v951
    %v1003 = vunpack.c.l.b16 %v888
    %v1004 = vunpack.c.h.b16 %v888
    %v1005 = vunpack.c.l.b16 %v889
    %v1006 = vunpack.c.h.b16 %v889
    %v1007 = vunpack.c.l.b16 %v890
    %v1008 = vunpack.c.h.b16 %v890
    %v1009 = vunpack.c.l.b16 %v891
    %v1010 = vunpack.c.h.b16 %v891
    %v1011 = vunpack.c.l.b16 %v892
    %v1012 = vunpack.c.h.b16 %v892
    %v1013 = vunpack.c.l.b16 %v893
    %v1014 = vunpack.c.h.b16 %v893
    %v1015 = vunpack.c.l.b16 %v894
    %v1016 = vunpack.c.h.b16 %v894
    %v1017 = vunpack.c.l.b16 %v895
    %v1018 = vunpack.c.h.b16 %v895
    %v1019 = vunpack.c.l.b16 %v896
    %v1020 = vunpack.c.h.b16 %v896
    %v1021 = vunpack.c.l.b16 %v897
    %v1022 = vunpack.c.h.b16 %v897
    %v1023 = vunpack.c.l.b16 %v898
    %v1024 = vunpack.c.h.b16 %v898
    %v1025 = vunpack.c.l.b16 %v899
    %v1026 = vunpack.c.h.b16 %v899
    %v1027 = vunpack.c.l.b16 %v900
    %v1028 = vunpack.c.h.b16 %v900
    %v1029 = vunpack.c.l.b16 %v901
    %v1030 = vunpack.c.h.b16 %v901
    %v1031 = vunpack.c.l.b16 %v902
    %v1032 = vunpack.c.h.b16 %v902
    %v1033 = vunpack.c.l.b16 %v903
    %v1034 = vunpack.c.h.b16 %v903
    %v1035 = vunpack.c.l.b16 %v904
    %v1036 = vunpack.c.h.b16 %v904
    %v1037 = vunpack.c.l.b16 %v905
    %v1038 = vunpack.c.h.b16 %v905
    %v1039 = vunpack.c.l.b16 %v906
    %v1040 = vunpack.c.h.b16 %v906
    %v1041 = vunpack.c.l.b16 %v907
    %v1042 = vunpack.c.h.b16 %v907
    %v1043 = vunpack.c.l.b16 %v908
    %v1044 = vunpack.c.h.b16 %v908
    %v1045 = vunpack.c.l.b16 %v909
    %v1046 = vunpack.c.h.b16 %v909
    %v1047 = vunpack.c.l.b16 %v910
    %v1048 = vunpack.c.h.b16 %v910
    %v1049 = vunpack.c.l.b16 %v911
    %v1050 = vunpack.c.h.b16 %v911
    %v1051 = vunpack.c.l.b16 %v912
    %v1052 = vunpack.c.h.b16 %v912
    %v1053 = vunpack.c.l.b16 %v913
    %v1054 = vunpack.c.h.b16 %v913
    %v1055 = vunpack.c.l.b16 %v914
    %v1056 = vunpack.c.h.b16 %v914
    %v1057 = vunpack.c.l.b16 %v915
    %v1058 = vunpack.c.h.b16 %v915
    %v1059 = vunpack.c.l.b16 %v916
    %v1060 = vunpack.c.h.b16 %v916
    %v1061 = vunpack.c.l.b16 %v917
    %v1062 = vunpack.c.h.b16 %v917
    %v1063 = vunpack.c.l.b16 %v918
    %v1064 = vunpack.c.h.b16 %v918
    %v1065 = vunpack.c.l.b16 %v919
    %v1066 = vunpack.c.h.b16 %v919
    %v1067 = vunpack.c.l.b16 %v920
    %v1068 = vunpack.c.h.b16 %v920
    %v1069 = vunpack.c.l.b16 %v921
    %v1070 = vunpack.c.h.b16 %v921
    %v1071 = vunpack.c.l.b16 %v922
    %v1072 = vunpack.c.h.b16 %v922
    %v1073 = vunpack.c.l.b16 %v923
    %v1074 = vunpack.c.h.b16 %v923
    %v1075 = vunpack.c.l.b16 %v924
    %v1076 = vunpack.c.h.b16 %v924
    %v1077 = vunpack.c.l.b16 %v925
    %v1078 = vunpack.c.h.b16 %v925
    %v1079 = vunpack.c.l.b16 %v926
    %v1080 = vunpack.c.h.b16 %v926
    %v1081 = vunpack.c.l.b16 %v927
    %v1082 = vunpack.c.h.b16 %v927
    %v1083 = vunpack.c.l.b16 %v928
    %v1084 = vunpack.c.h.b16 %v928
    %v1085 = vunpack.c.l.b16 %v929
    %v1086 = vunpack.c.h.b16 %v929
    %v1087 = vunpack.c.l.b16 %v930
    %v1088 = vunpack.c.h.b16 %v930
    %v1089 = vunpack.c.l.b16 %v931
    %v1090 = vunpack.c.h.b16 %v931
    %v1091 = vunpack.c.l.b16 %v932
    %v1092 = vunpack.c.h.b16 %v932
    %v1093 = vunpack.c.l.b16 %v933
    %v1094 = vunpack.c.h.b16 %v933
    %v1095 = vunpack.c.l.b16 %v934
    %v1096 = vunpack.c.h.b16 %v934
    %v1097 = vunpack.c.l.b16 %v935
    %v1098 = vunpack.c.h.b16 %v935
    %v1099 = vpack.c.b16 %v1005, %v1003
    %v1100 = vpack.c.b16 %v1006, %v1004
    %v1101 = vpack.c.b16 %v1009, %v1007
    %v1102 = vpack.c.b16 %v1010, %v1008
    %v1103 = vpack.c.b16 %v1013, %v1011
    %v1104 = vpack.c.b16 %v1014, %v1012
    %v1105 = vpack.c.b16 %v1017, %v1015
    %v1106 = vpack.c.b16 %v1018, %v1016
    %v1107 = vpack.c.b16 %v1021, %v1019
    %v1108 = vpack.c.b16 %v1022, %v1020
    %v1109 = vpack.c.b16 %v1025, %v1023
    %v1110 = vpack.c.b16 %v1026, %v1024
    %v1111 = vpack.c.b16 %v1029, %v1027
    %v1112 = vpack.c.b16 %v1030, %v1028
    %v1113 = vpack.c.b16 %v1033, %v1031
    %v1114 = vpack.c.b16 %v1034, %v1032
    %v1115 = vpack.c.b16 %v1037, %v1035
    %v1116 = vpack.c.b16 %v1038, %v1036
    %v1117 = vpack.c.b16 %v1041, %v1039
    %v1118 = vpack.c.b16 %v1042, %v1040
    %v1119 = vpack.c.b16 %v1045, %v1043
    %v1120 = vpack.c.b16 %v1046, %v1044
    %v1121 = vpack.c.b16 %v1049, %v1047
    %v1122 = vpack.c.b16 %v1050, %v1048
    %v1123 = vpack.c.b16 %v1053, %v1051
    %v1124 = vpack.c.b16 %v1054, %v1052
    %v1125 = vpack.c.b16 %v1057, %v1055
    %v1126 = vpack.c.b16 %v1058, %v1056
    %v1127 = vpack.c.b16 %v1061, %v1059
    %v1128 = vpack.c.b16 %v1062, %v1060
    %v1129 = vpack.c.b16 %v1065, %v1063
    %v1130 = vpack.c.b16 %v1066, %v1064
    %v1131 = vpack.c.b16 %v1069, %v1067
    %v1132 = vpack.c.b16 %v1070, %v1068
    %v1133 = vpack.c.b16 %v1073, %v1071
    %v1134 = vpack.c.b16 %v1074, %v1072
    %v1135 = vpack.c.b16 %v1077, %v1075
    %v1136 = vpack.c.b16 %v1078, %v1076
    %v1137 = vpack.c.b16 %v1081, %v1079
    %v1138 = vpack.c.b16 %v1082, %v1080
    %v1139 = vpack.c.b16 %v1085, %v1083
    %v1140 = vpack.c.b16 %v1086, %v1084
    %v1141 = vpack.c.b16 %v1089, %v1087
    %v1142 = vpack.c.b16 %v1090, %v1088
    %v1143 = vpack.c.b16 %v1093, %v1091
    %v1144 = vpack.c.b16 %v1094, %v1092
    %v1145 = vpack.c.b16 %v1097, %v1095
    %v1146 = vpack.c.b16 %v1098, %v1096
    %1195 = vmatprep.subr.bf16.mxu0 %v1114
    %1196 = vmatpush1.bf16.msra.mxu0 %v1113
    %1197 = vmatprep.subr.bf16.mxu0 %v1112
    %1198 = vmatpush1.bf16.msra.mxu0 %v1111
    %1199 = vmatprep.subr.bf16.mxu0 %v1110
    %1200 = vmatpush1.bf16.msra.mxu0 %v1109
    %1201 = vmatprep.subr.bf16.mxu0 %v1108
    %1202 = vmatpush1.bf16.msra.mxu0 %v1107
    %1203 = vmatprep.subr.bf16.mxu0 %v1106
    %1204 = vmatpush1.bf16.msra.mxu0 %v1105
    %1205 = vmatprep.subr.bf16.mxu0 %v1104
    %1206 = vmatpush1.bf16.msra.mxu0 %v1103
    %1207 = vmatprep.subr.bf16.mxu0 %v1102
    %1208 = vmatpush1.bf16.msra.mxu0 %v1101
    %1209 = vmatprep.subr.bf16.mxu0 %v1100
    %1210 = vmatpush1.bf16.msra.mxu0 %v1099
    %1211 = vmatprep.subr.bf16.mxu0 %v1130
    %1212 = vmatpush2.bf16.msra.mxu0 %v1129
    %1213 = vmatprep.subr.bf16.mxu0 %v1128
    %1214 = vmatpush2.bf16.msra.mxu0 %v1127
    %1215 = vmatprep.subr.bf16.mxu0 %v1126
    %1216 = vmatpush2.bf16.msra.mxu0 %v1125
    %1217 = vmatprep.subr.bf16.mxu0 %v1124
    %1218 = vmatpush2.bf16.msra.mxu0 %v1123
    %1219 = vmatprep.subr.bf16.mxu0 %v1122
    %1220 = vmatpush2.bf16.msra.mxu0 %v1121
    %1221 = vmatprep.subr.bf16.mxu0 %v1120
    %1222 = vmatpush2.bf16.msra.mxu0 %v1119
    %1223 = vmatprep.subr.bf16.mxu0 %v1118
    %1224 = vmatpush2.bf16.msra.mxu0 %v1117
    %1225 = vmatprep.subr.bf16.mxu0 %v1116
    %1226 = vmatpush2.bf16.msra.mxu0 %v1115
    %1227 = vmatprep.mubr.bf16.mxu0 %v942
    %1228 = vmatmul.mubr.bf16.gmra.mxu0 %v941
    %v1229 = vpop.f32.mrf.mxu0
    %v1230 = vadd.f32 %v948, %v1229
    %v1231 = vpop.f32.mrf.mxu0
    %v1232 = vadd.f32 %v952, %v1231
    %v1233 = vpop.f32.mrf.mxu0
    %v1234 = vpop.f32.mrf.mxu0
    %1235 = vdwg.mxu0
    %1236 = vmatprep.subr.bf16.mxu0 %v1146
    %1237 = vmatpush1.bf16.msra.mxu0 %v1145
    %1238 = vmatprep.subr.bf16.mxu0 %v1144
    %1239 = vmatpush1.bf16.msra.mxu0 %v1143
    %1240 = vmatprep.subr.bf16.mxu0 %v1142
    %1241 = vmatpush1.bf16.msra.mxu0 %v1141
    %1242 = vmatprep.subr.bf16.mxu0 %v1140
    %1243 = vmatpush1.bf16.msra.mxu0 %v1139
    %1244 = vmatprep.subr.bf16.mxu0 %v1138
    %1245 = vmatpush1.bf16.msra.mxu0 %v1137
    %1246 = vmatprep.subr.bf16.mxu0 %v1136
    %1247 = vmatpush1.bf16.msra.mxu0 %v1135
    %1248 = vmatprep.subr.bf16.mxu0 %v1134
    %1249 = vmatpush1.bf16.msra.mxu0 %v1133
    %1250 = vmatprep.subr.bf16.mxu0 %v1132
    %1251 = vmatpush1.bf16.msra.mxu0 %v1131
    %1252 = vmatprep.subr.bf16.mxu0 0
    %1253 = vmatpush2.bf16.msra.mxu0 0
    %1254 = vmatprep.subr.bf16.mxu0 0
    %1255 = vmatpush2.bf16.msra.mxu0 0
    %1256 = vmatprep.subr.bf16.mxu0 0
    %1257 = vmatpush2.bf16.msra.mxu0 0
    %1258 = vmatprep.subr.bf16.mxu0 0
    %1259 = vmatpush2.bf16.msra.mxu0 0
    %1260 = vmatprep.subr.bf16.mxu0 0
    %1261 = vmatpush2.bf16.msra.mxu0 0
    %1262 = vmatprep.subr.bf16.mxu0 0
    %1263 = vmatpush2.bf16.msra.mxu0 0
    %1264 = vmatprep.subr.bf16.mxu0 0
    %1265 = vmatpush2.bf16.msra.mxu0 0
    %1266 = vmatprep.subr.bf16.mxu0 0
    %1267 = vmatpush2.bf16.msra.mxu0 0
    %1268 = vmatprep.mubr.bf16.mxu0 0
    %1269 = vmatmul.mubr.bf16.gmra.mxu0 %v943
    %v1270 = vpop.f32.mrf.mxu0
    %v1271 = vadd.f32 %v1230, %v1270
    %v1272 = vpop.f32.mrf.mxu0
    %v1273 = vadd.f32 %v1232, %v1272
    %v1274 = vpop.f32.mrf.mxu0
    %v1275 = vpop.f32.mrf.mxu0
    %1276 = vdwg.mxu0
    %v1277 = vmax.f32 %v1271, 0.0
    %v1278 = vmax.f32 %v1273, 0.0
    %v1279 = vadd.f32 %v1277, 0.0
    %v1280 = vadd.f32 %v1278, 0.0
    %s1281 = scalar_lea.vmem [#allocation4], 3
    %v1282 = vld [vmem:[%s1281] ss:$4 sm:$0xff]
    %v1283 = vpack.c.bf16 %v1282, %v1282
    %1284 = vmatprep.subr.bf16.mxu0 %v1114
    %1285 = vmatpush1.bf16.msra.mxu0 %v1113
    %1286 = vmatprep.subr.bf16.mxu0 %v1112
    %1287 = vmatpush1.bf16.msra.mxu0 %v1111
    %1288 = vmatprep.subr.bf16.mxu0 %v1110
    %1289 = vmatpush1.bf16.msra.mxu0 %v1109
    %1290 = vmatprep.subr.bf16.mxu0 %v1108
    %1291 = vmatpush1.bf16.msra.mxu0 %v1107
    %1292 = vmatprep.subr.bf16.mxu0 %v1106
    %1293 = vmatpush1.bf16.msra.mxu0 %v1105
    %1294 = vmatprep.subr.bf16.mxu0 %v1104
    %1295 = vmatpush1.bf16.msra.mxu0 %v1103
    %1296 = vmatprep.subr.bf16.mxu0 %v1102
    %1297 = vmatpush1.bf16.msra.mxu0 %v1101
    %1298 = vmatprep.subr.bf16.mxu0 %v1100
    %1299 = vmatpush1.bf16.msra.mxu0 %v1099
    %1300 = vmatprep.subr.bf16.mxu0 %v1130
    %1301 = vmatpush2.bf16.msra.mxu0 %v1129
    %1302 = vmatprep.subr.bf16.mxu0 %v1128
    %1303 = vmatpush2.bf16.msra.mxu0 %v1127
    %1304 = vmatprep.subr.bf16.mxu0 %v1126
    %1305 = vmatpush2.bf16.msra.mxu0 %v1125
    %1306 = vmatprep.subr.bf16.mxu0 %v1124
    %1307 = vmatpush2.bf16.msra.mxu0 %v1123
    %1308 = vmatprep.subr.bf16.mxu0 %v1122
    %1309 = vmatpush2.bf16.msra.mxu0 %v1121
    %1310 = vmatprep.subr.bf16.mxu0 %v1120
    %1311 = vmatpush2.bf16.msra.mxu0 %v1119
    %1312 = vmatprep.subr.bf16.mxu0 %v1118
    %1313 = vmatpush2.bf16.msra.mxu0 %v1117
    %1314 = vmatprep.subr.bf16.mxu0 %v1116
    %1315 = vmatpush2.bf16.msra.mxu0 %v1115
    %1316 = vmatprep.mubr.bf16.mxu0 %v943
    %1317 = vmatmul.mubr.bf16.gmra.mxu0 %v942
    %v1318 = vpop.f32.mrf.mxu0
    %v1319 = vadd.f32 %v948, %v1318
    %v1320 = vpop.f32.mrf.mxu0
    %v1321 = vadd.f32 %v952, %v1320
    %v1322 = vpop.f32.mrf.mxu0
    %v1323 = vpop.f32.mrf.mxu0
    %1324 = vdwg.mxu0
    %1325 = vmatprep.subr.bf16.mxu0 %v1146
    %1326 = vmatpush1.bf16.msra.mxu0 %v1145
    %1327 = vmatprep.subr.bf16.mxu0 %v1144
    %1328 = vmatpush1.bf16.msra.mxu0 %v1143
    %1329 = vmatprep.subr.bf16.mxu0 %v1142
    %1330 = vmatpush1.bf16.msra.mxu0 %v1141
    %1331 = vmatprep.subr.bf16.mxu0 %v1140
    %1332 = vmatpush1.bf16.msra.mxu0 %v1139
    %1333 = vmatprep.subr.bf16.mxu0 %v1138
    %1334 = vmatpush1.bf16.msra.mxu0 %v1137
    %1335 = vmatprep.subr.bf16.mxu0 %v1136
    %1336 = vmatpush1.bf16.msra.mxu0 %v1135
    %1337 = vmatprep.subr.bf16.mxu0 %v1134
    %1338 = vmatpush1.bf16.msra.mxu0 %v1133
    %1339 = vmatprep.subr.bf16.mxu0 %v1132
    %1340 = vmatpush1.bf16.msra.mxu0 %v1131
    %1341 = vmatprep.subr.bf16.mxu0 0
    %1342 = vmatpush2.bf16.msra.mxu0 0
    %1343 = vmatprep.subr.bf16.mxu0 0
    %1344 = vmatpush2.bf16.msra.mxu0 0
    %1345 = vmatprep.subr.bf16.mxu0 0
    %1346 = vmatpush2.bf16.msra.mxu0 0
    %1347 = vmatprep.subr.bf16.mxu0 0
    %1348 = vmatpush2.bf16.msra.mxu0 0
    %1349 = vmatprep.subr.bf16.mxu0 0
    %1350 = vmatpush2.bf16.msra.mxu0 0
    %1351 = vmatprep.subr.bf16.mxu0 0
    %1352 = vmatpush2.bf16.msra.mxu0 0
    %1353 = vmatprep.subr.bf16.mxu0 0
    %1354 = vmatpush2.bf16.msra.mxu0 0
    %1355 = vmatprep.subr.bf16.mxu0 0
    %1356 = vmatpush2.bf16.msra.mxu0 0
    %1357 = vmatprep.mubr.bf16.mxu0 0
    %1358 = vmatmul.mubr.bf16.gmra.mxu0 %v1283
    %v1359 = vpop.f32.mrf.mxu0
    %v1360 = vadd.f32 %v1319, %v1359
    %v1361 = vpop.f32.mrf.mxu0
    %v1362 = vadd.f32 %v1321, %v1361
    %v1363 = vpop.f32.mrf.mxu0
    %v1364 = vpop.f32.mrf.mxu0
    %1365 = vdwg.mxu0
    %v1366 = vmax.f32 %v1360, 0.0
    %v1367 = vmax.f32 %v1362, 0.0
    %v1368 = vadd.f32 %v1279, %v1366
    %v1369 = vadd.f32 %v1280, %v1367
    %s1370 = scalar_lea.vmem [#allocation4], 4
    %v1371 = vld [vmem:[%s1370] ss:$4 sm:$0xff]
    %v1372 = vpack.c.bf16 %v1371, %v1371
    %1373 = vmatprep.subr.bf16.mxu0 %v1114
    %1374 = vmatpush1.bf16.msra.mxu0 %v1113
    %1375 = vmatprep.subr.bf16.mxu0 %v1112
    %1376 = vmatpush1.bf16.msra.mxu0 %v1111
    %1377 = vmatprep.subr.bf16.mxu0 %v1110
    %1378 = vmatpush1.bf16.msra.mxu0 %v1109
    %1379 = vmatprep.subr.bf16.mxu0 %v1108
    %1380 = vmatpush1.bf16.msra.mxu0 %v1107
    %1381 = vmatprep.subr.bf16.mxu0 %v1106
    %1382 = vmatpush1.bf16.msra.mxu0 %v1105
    %1383 = vmatprep.subr.bf16.mxu0 %v1104
    %1384 = vmatpush1.bf16.msra.mxu0 %v1103
    %1385 = vmatprep.subr.bf16.mxu0 %v1102
    %1386 = vmatpush1.bf16.msra.mxu0 %v1101
    %1387 = vmatprep.subr.bf16.mxu0 %v1100
    %1388 = vmatpush1.bf16.msra.mxu0 %v1099
    %1389 = vmatprep.subr.bf16.mxu0 %v1130
    %1390 = vmatpush2.bf16.msra.mxu0 %v1129
    %1391 = vmatprep.subr.bf16.mxu0 %v1128
    %1392 = vmatpush2.bf16.msra.mxu0 %v1127
    %1393 = vmatprep.subr.bf16.mxu0 %v1126
    %1394 = vmatpush2.bf16.msra.mxu0 %v1125
    %1395 = vmatprep.subr.bf16.mxu0 %v1124
    %1396 = vmatpush2.bf16.msra.mxu0 %v1123
    %1397 = vmatprep.subr.bf16.mxu0 %v1122
    %1398 = vmatpush2.bf16.msra.mxu0 %v1121
    %1399 = vmatprep.subr.bf16.mxu0 %v1120
    %1400 = vmatpush2.bf16.msra.mxu0 %v1119
    %1401 = vmatprep.subr.bf16.mxu0 %v1118
    %1402 = vmatpush2.bf16.msra.mxu0 %v1117
    %1403 = vmatprep.subr.bf16.mxu0 %v1116
    %1404 = vmatpush2.bf16.msra.mxu0 %v1115
    %1405 = vmatprep.mubr.bf16.mxu0 %v1283
    %1406 = vmatmul.mubr.bf16.gmra.mxu0 %v943
    %v1407 = vpop.f32.mrf.mxu0
    %v1408 = vadd.f32 %v948, %v1407
    %v1409 = vpop.f32.mrf.mxu0
    %v1410 = vadd.f32 %v952, %v1409
    %v1411 = vpop.f32.mrf.mxu0
    %v1412 = vpop.f32.mrf.mxu0
    %1413 = vdwg.mxu0
    %1414 = vmatprep.subr.bf16.mxu0 %v1146
    %1415 = vmatpush1.bf16.msra.mxu0 %v1145
    %1416 = vmatprep.subr.bf16.mxu0 %v1144
    %1417 = vmatpush1.bf16.msra.mxu0 %v1143
    %1418 = vmatprep.subr.bf16.mxu0 %v1142
    %1419 = vmatpush1.bf16.msra.mxu0 %v1141
    %1420 = vmatprep.subr.bf16.mxu0 %v1140
    %1421 = vmatpush1.bf16.msra.mxu0 %v1139
    %1422 = vmatprep.subr.bf16.mxu0 %v1138
    %1423 = vmatpush1.bf16.msra.mxu0 %v1137
    %1424 = vmatprep.subr.bf16.mxu0 %v1136
    %1425 = vmatpush1.bf16.msra.mxu0 %v1135
    %1426 = vmatprep.subr.bf16.mxu0 %v1134
    %1427 = vmatpush1.bf16.msra.mxu0 %v1133
    %1428 = vmatprep.subr.bf16.mxu0 %v1132
    %1429 = vmatpush1.bf16.msra.mxu0 %v1131
    %1430 = vmatprep.subr.bf16.mxu0 0
    %1431 = vmatpush2.bf16.msra.mxu0 0
    %1432 = vmatprep.subr.bf16.mxu0 0
    %1433 = vmatpush2.bf16.msra.mxu0 0
    %1434 = vmatprep.subr.bf16.mxu0 0
    %1435 = vmatpush2.bf16.msra.mxu0 0
    %1436 = vmatprep.subr.bf16.mxu0 0
    %1437 = vmatpush2.bf16.msra.mxu0 0
    %1438 = vmatprep.subr.bf16.mxu0 0
    %1439 = vmatpush2.bf16.msra.mxu0 0
    %1440 = vmatprep.subr.bf16.mxu0 0
    %1441 = vmatpush2.bf16.msra.mxu0 0
    %1442 = vmatprep.subr.bf16.mxu0 0
    %1443 = vmatpush2.bf16.msra.mxu0 0
    %1444 = vmatprep.subr.bf16.mxu0 0
    %1445 = vmatpush2.bf16.msra.mxu0 0
    %1446 = vmatprep.mubr.bf16.mxu0 0
    %1447 = vmatmul.mubr.bf16.gmra.mxu0 %v1372
    %v1448 = vpop.f32.mrf.mxu0
    %v1449 = vadd.f32 %v1408, %v1448
    %v1450 = vpop.f32.mrf.mxu0
    %v1451 = vadd.f32 %v1410, %v1450
    %v1452 = vpop.f32.mrf.mxu0
    %v1453 = vpop.f32.mrf.mxu0
    %1454 = vdwg.mxu0
    %v1455 = vmax.f32 %v1449, 0.0
    %v1456 = vmax.f32 %v1451, 0.0
    %v1457 = vadd.f32 %v1368, %v1455
    %v1458 = vadd.f32 %v1369, %v1456
    %1459 = vmatprep.subr.bf16.mxu0 %v1114
    %1460 = vmatpush1.bf16.msra.mxu0 %v1113
    %1461 = vmatprep.subr.bf16.mxu0 %v1112
    %1462 = vmatpush1.bf16.msra.mxu0 %v1111
    %1463 = vmatprep.subr.bf16.mxu0 %v1110
    %1464 = vmatpush1.bf16.msra.mxu0 %v1109
    %1465 = vmatprep.subr.bf16.mxu0 %v1108
    %1466 = vmatpush1.bf16.msra.mxu0 %v1107
    %1467 = vmatprep.subr.bf16.mxu0 %v1106
    %1468 = vmatpush1.bf16.msra.mxu0 %v1105
    %1469 = vmatprep.subr.bf16.mxu0 %v1104
    %1470 = vmatpush1.bf16.msra.mxu0 %v1103
    %1471 = vmatprep.subr.bf16.mxu0 %v1102
    %1472 = vmatpush1.bf16.msra.mxu0 %v1101
    %1473 = vmatprep.subr.bf16.mxu0 %v1100
    %1474 = vmatpush1.bf16.msra.mxu0 %v1099
    %1475 = vmatprep.subr.bf16.mxu0 %v1130
    %1476 = vmatpush2.bf16.msra.mxu0 %v1129
    %1477 = vmatprep.subr.bf16.mxu0 %v1128
    %1478 = vmatpush2.bf16.msra.mxu0 %v1127
    %1479 = vmatprep.subr.bf16.mxu0 %v1126
    %1480 = vmatpush2.bf16.msra.mxu0 %v1125
    %1481 = vmatprep.subr.bf16.mxu0 %v1124
    %1482 = vmatpush2.bf16.msra.mxu0 %v1123
    %1483 = vmatprep.subr.bf16.mxu0 %v1122
    %1484 = vmatpush2.bf16.msra.mxu0 %v1121
    %1485 = vmatprep.subr.bf16.mxu0 %v1120
    %1486 = vmatpush2.bf16.msra.mxu0 %v1119
    %1487 = vmatprep.subr.bf16.mxu0 %v1118
    %1488 = vmatpush2.bf16.msra.mxu0 %v1117
    %1489 = vmatprep.subr.bf16.mxu0 %v1116
    %1490 = vmatpush2.bf16.msra.mxu0 %v1115
    %1491 = vmatprep.mubr.bf16.mxu0 %v1372
    %1492 = vmatmul.mubr.bf16.gmra.mxu0 %v1283
    %v1493 = vpop.f32.mrf.mxu0
    %v1494 = vadd.f32 %v948, %v1493
    %v1495 = vpop.f32.mrf.mxu0
    %v1496 = vadd.f32 %v952, %v1495
    %v1497 = vpop.f32.mrf.mxu0
    %v1498 = vpop.f32.mrf.mxu0
    %1499 = vdwg.mxu0
    %1500 = vmatprep.subr.bf16.mxu0 %v1146
    %1501 = vmatpush1.bf16.msra.mxu0 %v1145
    %1502 = vmatprep.subr.bf16.mxu0 %v1144
    %1503 = vmatpush1.bf16.msra.mxu0 %v1143
    %1504 = vmatprep.subr.bf16.mxu0 %v1142
    %1505 = vmatpush1.bf16.msra.mxu0 %v1141
    %1506 = vmatprep.subr.bf16.mxu0 %v1140
    %1507 = vmatpush1.bf16.msra.mxu0 %v1139
    %1508 = vmatprep.subr.bf16.mxu0 %v1138
    %1509 = vmatpush1.bf16.msra.mxu0 %v1137
    %1510 = vmatprep.subr.bf16.mxu0 %v1136
    %1511 = vmatpush1.bf16.msra.mxu0 %v1135
    %1512 = vmatprep.subr.bf16.mxu0 %v1134
    %1513 = vmatpush1.bf16.msra.mxu0 %v1133
    %1514 = vmatprep.subr.bf16.mxu0 %v1132
    %1515 = vmatpush1.bf16.msra.mxu0 %v1131
    %1516 = vmatprep.subr.bf16.mxu0 0
    %1517 = vmatpush2.bf16.msra.mxu0 0
    %1518 = vmatprep.subr.bf16.mxu0 0
    %1519 = vmatpush2.bf16.msra.mxu0 0
    %1520 = vmatprep.subr.bf16.mxu0 0
    %1521 = vmatpush2.bf16.msra.mxu0 0
    %1522 = vmatprep.subr.bf16.mxu0 0
    %1523 = vmatpush2.bf16.msra.mxu0 0
    %1524 = vmatprep.subr.bf16.mxu0 0
    %1525 = vmatpush2.bf16.msra.mxu0 0
    %1526 = vmatprep.subr.bf16.mxu0 0
    %1527 = vmatpush2.bf16.msra.mxu0 0
    %1528 = vmatprep.subr.bf16.mxu0 0
    %1529 = vmatpush2.bf16.msra.mxu0 0
    %1530 = vmatprep.subr.bf16.mxu0 0
    %1531 = vmatpush2.bf16.msra.mxu0 0
    %1532 = vmatprep.mubr.bf16.mxu0 0
    %1533 = vmatmul.mubr.bf16.gmra.mxu0 %v941
    %v1534 = vpop.f32.mrf.mxu0
    %v1535 = vadd.f32 %v1494, %v1534
    %v1536 = vpop.f32.mrf.mxu0
    %v1537 = vadd.f32 %v1496, %v1536
    %v1538 = vpop.f32.mrf.mxu0
    %v1539 = vpop.f32.mrf.mxu0
    %1540 = vdwg.mxu0
    %v1541 = vmax.f32 %v1535, 0.0
    %v1542 = vmax.f32 %v1537, 0.0
    %v1543 = vadd.f32 %v1457, %v1541
    %v1544 = vadd.f32 %v1458, %v1542
    %v1545 = vmul.f32 %v1543, 0.25
    %v1546 = vmul.f32 %v1544, 0.25
    %v1547 = vpack.c.bf16 %v1545, %v1545
    %v1548 = vpack.c.bf16 %v1546, %v1546
    %v1549 = vld [vmem:[%s7] sm:$0xf]
    %v1550 = vld [vmem:[%s7 + $0x4] sm:$0xf]
    %v1551 = vld [vmem:[%s7 + $0x8] sm:$0xf]
    %v1552 = vld [vmem:[%s7 + $0xc] sm:$0xf]
    %v1553 = vld [vmem:[%s7 + $0x10] sm:$0xf]
    %v1554 = vld [vmem:[%s7 + $0x14] sm:$0xf]
    %v1555 = vld [vmem:[%s7 + $0x18] sm:$0xf]
    %v1556 = vld [vmem:[%s7 + $0x1c] sm:$0xf]
    %v1557 = vld [vmem:[%s7 + $0x20] sm:$0xf]
    %v1558 = vld [vmem:[%s7 + $0x24] sm:$0xf]
    %v1559 = vld [vmem:[%s7 + $0x28] sm:$0xf]
    %v1560 = vld [vmem:[%s7 + $0x2c] sm:$0xf]
    %v1561 = vld [vmem:[%s7 + $0x30] sm:$0xf]
    %v1562 = vld [vmem:[%s7 + $0x34] sm:$0xf]
    %v1563 = vld [vmem:[%s7 + $0x38] sm:$0xf]
    %v1564 = vld [vmem:[%s7 + $0x3c] sm:$0xf]
    %v1565 = vld [vmem:[%s7 + $0x40] sm:$0xf]
    %v1566 = vld [vmem:[%s7 + $0x44] sm:$0xf]
    %v1567 = vld [vmem:[%s7 + $0x48] sm:$0xf]
    %v1568 = vld [vmem:[%s7 + $0x4c] sm:$0xf]
    %v1569 = vld [vmem:[%s7 + $0x50] sm:$0xf]
    %v1570 = vld [vmem:[%s7 + $0x54] sm:$0xf]
    %v1571 = vld [vmem:[%s7 + $0x58] sm:$0xf]
    %v1572 = vld [vmem:[%s7 + $0x5c] sm:$0xf]
    %v1573 = vld [vmem:[%s7 + $0x60] sm:$0xf]
    %v1574 = vld [vmem:[%s7 + $0x64] sm:$0xf]
    %v1575 = vld [vmem:[%s7 + $0x68] sm:$0xf]
    %v1576 = vld [vmem:[%s7 + $0x6c] sm:$0xf]
    %v1577 = vld [vmem:[%s7 + $0x70] sm:$0xf]
    %v1578 = vld [vmem:[%s7 + $0x74] sm:$0xf]
    %v1579 = vld [vmem:[%s7 + $0x78] sm:$0xf]
    %v1580 = vld [vmem:[%s7 + $0x7c] sm:$0xf]
    %v1581 = vld [vmem:[%s8] sm:$0x1]
    %v1583 = vlaneseq
    %v1584 = vshrl.u32 %v1583, 7
    %v1585 = vsub.s32 0, %v1584
    %v1586 = vrot.slane %v1581, %v1585
    %v1620 = vunpack.c.l.b16 %v1549
    %v1621 = vunpack.c.l.b16 %v1550
    %v1622 = vunpack.c.l.b16 %v1551
    %v1623 = vunpack.c.l.b16 %v1552
    %v1624 = vunpack.c.l.b16 %v1553
    %v1625 = vunpack.c.l.b16 %v1554
    %v1626 = vunpack.c.l.b16 %v1555
    %v1627 = vunpack.c.l.b16 %v1556
    %v1628 = vunpack.c.l.b16 %v1557
    %v1629 = vunpack.c.l.b16 %v1558
    %v1630 = vunpack.c.l.b16 %v1559
    %v1631 = vunpack.c.l.b16 %v1560
    %v1632 = vunpack.c.l.b16 %v1561
    %v1633 = vunpack.c.l.b16 %v1562
    %v1634 = vunpack.c.l.b16 %v1563
    %v1635 = vunpack.c.l.b16 %v1564
    %v1636 = vunpack.c.l.b16 %v1565
    %v1637 = vunpack.c.l.b16 %v1566
    %v1638 = vunpack.c.l.b16 %v1567
    %v1639 = vunpack.c.l.b16 %v1568
    %v1640 = vunpack.c.l.b16 %v1569
    %v1641 = vunpack.c.l.b16 %v1570
    %v1642 = vunpack.c.l.b16 %v1571
    %v1643 = vunpack.c.l.b16 %v1572
    %v1644 = vunpack.c.l.b16 %v1573
    %v1645 = vunpack.c.l.b16 %v1574
    %v1646 = vunpack.c.l.b16 %v1575
    %v1647 = vunpack.c.l.b16 %v1576
    %v1648 = vunpack.c.l.b16 %v1577
    %v1649 = vunpack.c.l.b16 %v1578
    %v1650 = vunpack.c.l.b16 %v1579
    %v1651 = vunpack.c.l.b16 %v1580
    %v1652 = vpack.c.b16 %v1621, %v1620
    %v1653 = vpack.c.b16 %v1623, %v1622
    %v1654 = vpack.c.b16 %v1625, %v1624
    %v1655 = vpack.c.b16 %v1627, %v1626
    %v1656 = vpack.c.b16 %v1629, %v1628
    %v1657 = vpack.c.b16 %v1631, %v1630
    %v1658 = vpack.c.b16 %v1633, %v1632
    %v1659 = vpack.c.b16 %v1635, %v1634
    %v1660 = vpack.c.b16 %v1637, %v1636
    %v1661 = vpack.c.b16 %v1639, %v1638
    %v1662 = vpack.c.b16 %v1641, %v1640
    %v1663 = vpack.c.b16 %v1643, %v1642
    %v1664 = vpack.c.b16 %v1645, %v1644
    %v1665 = vpack.c.b16 %v1647, %v1646
    %v1666 = vpack.c.b16 %v1649, %v1648
    %v1667 = vpack.c.b16 %v1651, %v1650
    %1684 = vmatprep.subr.bf16.mxu0 0
    %1685 = vmatpush1.bf16.msra.mxu0 %v1659
    %1686 = vmatprep.subr.bf16.mxu0 0
    %1687 = vmatpush1.bf16.msra.mxu0 %v1658
    %1688 = vmatprep.subr.bf16.mxu0 0
    %1689 = vmatpush1.bf16.msra.mxu0 %v1657
    %1690 = vmatprep.subr.bf16.mxu0 0
    %1691 = vmatpush1.bf16.msra.mxu0 %v1656
    %1692 = vmatprep.subr.bf16.mxu0 0
    %1693 = vmatpush1.bf16.msra.mxu0 %v1655
    %1694 = vmatprep.subr.bf16.mxu0 0
    %1695 = vmatpush1.bf16.msra.mxu0 %v1654
    %1696 = vmatprep.subr.bf16.mxu0 0
    %1697 = vmatpush1.bf16.msra.mxu0 %v1653
    %1698 = vmatprep.subr.bf16.mxu0 0
    %1699 = vmatpush1.bf16.msra.mxu0 %v1652
    %1700 = vmatprep.subr.bf16.mxu0 0
    %1701 = vmatpush2.bf16.msra.mxu0 %v1667
    %1702 = vmatprep.subr.bf16.mxu0 0
    %1703 = vmatpush2.bf16.msra.mxu0 %v1666
    %1704 = vmatprep.subr.bf16.mxu0 0
    %1705 = vmatpush2.bf16.msra.mxu0 %v1665
    %1706 = vmatprep.subr.bf16.mxu0 0
    %1707 = vmatpush2.bf16.msra.mxu0 %v1664
    %1708 = vmatprep.subr.bf16.mxu0 0
    %1709 = vmatpush2.bf16.msra.mxu0 %v1663
    %1710 = vmatprep.subr.bf16.mxu0 0
    %1711 = vmatpush2.bf16.msra.mxu0 %v1662
    %1712 = vmatprep.subr.bf16.mxu0 0
    %1713 = vmatpush2.bf16.msra.mxu0 %v1661
    %1714 = vmatprep.subr.bf16.mxu0 0
    %1715 = vmatpush2.bf16.msra.mxu0 %v1660
    %1716 = vmatprep.mubr.bf16.mxu0 %v1548
    %1717 = vmatmul.mubr.bf16.gmra.mxu0 %v1547
    %v1718 = vpop.f32.mrf.mxu0
    %v1719 = vadd.f32 %v1586, %v1718
    %v1720 = vpop.f32.mrf.mxu0
    %v1721 = vpop.f32.mrf.mxu0
    %v1722 = vpop.f32.mrf.mxu0
    %1723 = vdwg.mxu0
    %vm1724 = vcmask 261120
    %1725 = vst.msk [vmem:[#allocation8] sm:$0xff] %vm1724, %v1719
    // Predicated region
    $region42: #{tpu_custom_call.1} parent=1 // pred_check
      _
    $region43: #{tpu_custom_call.1} parent=1 // pred_check_branch
      %1727 = sbr.rel (0) target = $region45
    $region44: #{tpu_custom_call.1} parent=1 // pred_region
      %s1729 = ssub.s32 128, 128
      %1730 = vsyncadd [#allocation7], %s1729
      %s1732 = sshll.u32 [#allocation8], 4
      %s1733 = int_to_ptr.vmem [resolvable:$true] %s1732
      %1735 = dma.vmem_to_hbm [thread:$0]  %s1733, 128, %s9, [#allocation7]
    $region45: #{tpu_custom_call.1} parent=1 // pred_fallthru
      _
    // Predicated region
    $region46: #{tpu_custom_call.1} parent=1 // pred_check
      _
    $region47: #{tpu_custom_call.1} parent=1 // pred_check_branch
      %1737 = sbr.rel (0) target = $region49
    $region48: #{tpu_custom_call.1} parent=1 // pred_region
      %1738 = dma.done [#allocation7], 128
    $region49: #{tpu_custom_call.1} parent=1 // pred_fallthru
      _
    %1739 = vsyncpa [#allocation6], 1
    %1740 = vsyncpa [#allocation7], 1

</llo_original>
